<compile_context>
chip_gen: v7x
topology: tpu7x:2x2x1
jax: 0.10.0
libtpu: 0.0.40
codegen_flags: <defaults>
</compile_context>

<pallas_src>
import math
import numpy as np
import jax
import jax.numpy as jnp
from jax.experimental import pallas as pl
from jax.experimental.pallas import tpu as pltpu

# ----------------------------- hyper-parameters ------------------------------
NTOKEN = 100
D_MODEL = 32
D_HIDDEN = 64
NHEAD = 4
NLAYER = 4
SEQ_LEN = 64      # MaxPool1d(64) over the original dim-0 axis => seq must be 64
BATCH = 2
HEAD_DIM = D_MODEL // NHEAD


def _sinusoid_table(n_position, d_hid):
    # identical math to PositionalEncoding._get_sinusoid_encoding_table
    pos = np.arange(n_position, dtype=np.float64)[:, None]
    table = pos / np.power(10000.0, 2.0 * (np.arange(d_hid) // 2) / d_hid)[None, :]
    table[:, 0::2] = np.sin(table[:, 0::2])
    table[:, 1::2] = np.cos(table[:, 1::2])
    return jnp.asarray(table, dtype=jnp.float32)          # (n_position, d_hid)


def _layer_norm(x, g, b, eps=1e-5):
    mu = jnp.mean(x, axis=-1, keepdims=True)
    var = jnp.mean(jnp.square(x - mu), axis=-1, keepdims=True)
    return (x - mu) * jax.lax.rsqrt(var + eps) * g + b


def _make_kernel(nlayer, nhead):
    def kernel(x_ref,            # (S, D) f32: emb*sqrt(D) + pos-enc, one batch element
               w_qkv_ref,        # (L, D, 3D)  bf16, fused QKV; 1/sqrt(hd) folded into Q cols
               w_out_ref,        # (L, D, D)   bf16, attention out-projection
               w_ff1_ref,        # (L, D, Dh)  bf16
               w_ff2_ref,        # (L, Dh, D)  bf16
               vecs_ref,         # (L, 8, 3D)  f32 packed vectors (see init_params)
               w_ui_ref,         # (D, 2D)     bf16 fused u/i decoder weight
               b_ui_ref,         # (1, 2D)     f32  fused u/i decoder bias
               u_ref, i_ref, r_ref):
        S, D = x_ref.shape
        Dh = w_ff1_ref.shape[2]
        hd = D // nhead

        x0 = x_ref[...]                                    # (S, D) f32
        # TODO(synk): all nn.Dropout layers are treated as identity (eval mode).

        def layer(l, x):
            # dynamic leading-axis loads of the per-layer weight stacks
            w_qkv = w_qkv_ref[l]                           # (D, 3D) bf16
            w_out = w_out_ref[l]                           # (D, D)  bf16
            w_ff1 = w_ff1_ref[l]                           # (D, Dh) bf16
            w_ff2 = w_ff2_ref[l]                           # (Dh, D) bf16
            vd = vecs_ref[l]                               # (8, 3D) f32
            b_qkv = vd[0:1, :]                             # (1, 3D)
            b_ff1 = vd[1:2, :Dh]                           # (1, Dh)
            b_out = vd[2:3, :D]
            ln1_g, ln1_b = vd[3:4, :D], vd[4:5, :D]
            ln2_g, ln2_b = vd[5:6, :D], vd[6:7, :D]
            b_ff2 = vd[7:8, :D]

            # ---- fused QKV projection: one (S,D)@(D,3D) MXU op per layer ----
            qkv = jnp.dot(x.astype(jnp.bfloat16), w_qkv,
                          preferred_element_type=jnp.float32) + b_qkv   # (S, 3D)

            # ---- per-head attention over a per-batch (S,S) score matrix -----
            heads = []
            for h in range(nhead):
                qh = qkv[:, h * hd:(h + 1) * hd]
                kh = qkv[:, D + h * hd:D + (h + 1) * hd]
                vh = qkv[:, 2 * D + h * hd:2 * D + (h + 1) * hd]
                sc = jax.lax.dot_general(                  # (S, S), scale pre-folded
                    qh.astype(jnp.bfloat16), kh.astype(jnp.bfloat16),
                    (((1,), (1,)), ((), ())),
                    preferred_element_type=jnp.float32)
                sc = sc - jnp.max(sc, axis=-1, keepdims=True)
                p = jnp.exp(sc)
                p = p * pl.reciprocal(jnp.sum(p, axis=-1, keepdims=True),
                                      approx=True)
                heads.append(jnp.dot(p.astype(jnp.bfloat16),
                                     vh.astype(jnp.bfloat16),
                                     preferred_element_type=jnp.float32))
            concat = jnp.concatenate(heads, axis=-1)       # (S, D)

            # ---- fused out-projection: single (S,D)@(D,D) MXU op ------------
            attn = jnp.dot(concat.astype(jnp.bfloat16), w_out,
                           preferred_element_type=jnp.float32) + b_out

            # ---- post-norm encoder layer (norm_first=False, activation=relu)
            y = _layer_norm(x + attn, ln1_g, ln1_b)
            ff = jnp.maximum(
                jnp.dot(y.astype(jnp.bfloat16), w_ff1,
                        preferred_element_type=jnp.float32) + b_ff1, 0.0)
            ff = jnp.dot(ff.astype(jnp.bfloat16), w_ff2,
                         preferred_element_type=jnp.float32) + b_ff2
            return _layer_norm(y + ff, ln2_g, ln2_b)

        x = jax.lax.fori_loop(0, nlayer, layer, x0)

        # MaxPool1d(64) over the seq axis (S == 64 -> one window) => (1, D)
        pooled = jnp.max(x, axis=0, keepdims=True)

        # u/i decoders fused into one (D, 2D) matmul; r = <u, i>
        ui = jnp.dot(pooled.astype(jnp.bfloat16), w_ui_ref[...],
                     preferred_element_type=jnp.float32) + b_ui_ref[...]
        u = ui[:, :D]
        i = ui[:, D:2 * D]
        u_ref[...] = u
        i_ref[...] = i
        r_ref[...] = jnp.sum(u * i, axis=-1, keepdims=True)

    return kernel


def init_params(key):
    D, Dh, L, H, hd = D_MODEL, D_HIDDEN, NLAYER, NHEAD, HEAD_DIM
    ks = jax.random.split(key, 9)

    def nrm(k, shape, scale=0.05):
        return (scale * jax.random.normal(k, shape)).astype(jnp.float32)

    # Fused (in, 3*out) QKV weight; fold the 1/sqrt(head_dim) attention scale
    # into the Q columns (the Q bias in vecs row 0 is zero, so no bias rescale).
    w_qkv = nrm(ks[1], (L, D, 3 * D))
    w_qkv = w_qkv.at[:, :, :D].multiply(1.0 / math.sqrt(hd))

    # Packed per-layer vector params, one (8, 3D) f32 slab per layer:
    #   row 0: b_qkv(3D) | 1: b_ff1(Dh) | 2: b_out(D) | 3: ln1_gamma
    #   4: ln1_beta | 5: ln2_gamma | 6: ln2_beta | 7: b_ff2
    vecs = jnp.zeros((L, 8, 3 * D), jnp.float32)
    vecs = vecs.at[:, 3, :D].set(1.0)
    vecs = vecs.at[:, 5, :D].set(1.0)

    bf16 = jnp.bfloat16
    params = {
        "embedding": nrm(ks[0], (NTOKEN, D), 0.1),
        "pos_table": _sinusoid_table(5000, D),
        "w_qkv": w_qkv.astype(bf16),                       # (L, D, 3D)
        "w_out": nrm(ks[2], (L, D, D)).astype(bf16),       # (L, D, D)
        "w_ff1": nrm(ks[3], (L, D, Dh)).astype(bf16),      # (L, D, Dh)
        "w_ff2": nrm(ks[4], (L, Dh, D)).astype(bf16),      # (L, Dh, D)
        "vecs": vecs,                                      # (L, 8, 3D) f32
        # u/i decoders fused: columns [0:D] = u_decode, [D:2D] = i_decode
        "w_ui": jnp.concatenate([nrm(ks[5], (D, D)), nrm(ks[6], (D, D))],
                                axis=-1).astype(bf16),     # (D, 2D)
        "b_ui": jnp.concatenate([nrm(ks[7], (1, D)), nrm(ks[8], (1, D))],
                                axis=-1),                  # (1, 2D) f32
        # NOTE: self.r_decode exists in the PyTorch __init__ but is unused in forward().
    }
    return params


def transformer_forward(tokens, params):
    # tokens: (S, B) int32, matching the PyTorch (seq-first) input convention.
    S, B = tokens.shape
    D = D_MODEL
    # Glue in plain JAX: embedding gather, sqrt(d) scale, and the PyTorch
    # PositionalEncoding quirk -- the table is sliced with x.size(1) (== batch
    # for seq-first input), so PE row b is added to every position of batch b.
    emb = params["embedding"][tokens] * math.sqrt(D)              # (S, B, D)
    x = jnp.transpose(emb, (1, 0, 2))                             # (B, S, D)
    x = (x + params["pos_table"][:B][:, None, :]).astype(jnp.float32)

    weights = [params["w_qkv"], params["w_out"], params["w_ff1"],
               params["w_ff2"], params["vecs"], params["w_ui"], params["b_ui"]]

    def full_spec(arr):
        nd = arr.ndim
        return pl.BlockSpec(arr.shape, lambda b, _nd=nd: (0,) * _nd)

    out_vec_spec = pl.BlockSpec((None, 1, D), lambda b: (b, 0, 0))
    u, i, r = pl.pallas_call(
        _make_kernel(NLAYER, NHEAD),
        grid=(B,),
        out_shape=(jax.ShapeDtypeStruct((B, 1, D), jnp.float32),
                   jax.ShapeDtypeStruct((B, 1, D), jnp.float32),
                   jax.ShapeDtypeStruct((B, 1, 1), jnp.float32)),
        in_specs=[pl.BlockSpec((None, S, D), lambda b: (b, 0, 0))]
                 + [full_spec(w) for w in weights],
        out_specs=(out_vec_spec, out_vec_spec,
                   pl.BlockSpec((None, 1, 1), lambda b: (b, 0, 0))),
        compiler_params=pltpu.CompilerParams(
            dimension_semantics=("parallel",)),
    )(x, *weights)
    return u[:, 0], i[:, 0], r[:, 0, 0]


if __name__ == "__main__":
    key = jax.random.PRNGKey(0)
    pkey, tkey = jax.random.split(key)
    params = init_params(pkey)
    tokens = jax.random.randint(tkey, (SEQ_LEN, BATCH), 0, NTOKEN, dtype=jnp.int32)

    u_embs, i_embs, r = jax.jit(transformer_forward)(tokens, params)
    (u_embs, i_embs, r) = jax.block_until_ready((u_embs, i_embs, r))

    assert u_embs.shape == (BATCH, D_MODEL)
    assert i_embs.shape == (BATCH, D_MODEL)
    assert r.shape == (BATCH,)
    assert bool(jnp.all(jnp.isfinite(u_embs)))
    assert bool(jnp.all(jnp.isfinite(i_embs)))
    assert bool(jnp.all(jnp.isfinite(r)))
    print("KERNEL_OK")
</pallas_src>

<mosaic_0001>
module attributes {stable_mosaic.version = 11 : i64} {
  func.func @kernel(%arg0: i32, %arg1: memref<1x64x32xf32, #tpu.memory_space<vmem>>, %arg2: memref<4x32x96xbf16, #tpu.memory_space<vmem>>, %arg3: memref<4x32x32xbf16, #tpu.memory_space<vmem>>, %arg4: memref<4x32x64xbf16, #tpu.memory_space<vmem>>, %arg5: memref<4x64x32xbf16, #tpu.memory_space<vmem>>, %arg6: memref<4x8x96xf32, #tpu.memory_space<vmem>>, %arg7: memref<32x64xbf16, #tpu.memory_space<vmem>>, %arg8: memref<1x64xf32, #tpu.memory_space<vmem>>, %arg9: memref<1x1x32xf32, #tpu.memory_space<vmem>>, %arg10: memref<1x1x32xf32, #tpu.memory_space<vmem>>, %arg11: memref<1x1x1xf32, #tpu.memory_space<vmem>>) attributes {dimension_semantics = [#tpu.dimension_semantics<parallel>], iteration_bounds = array<i64: 2>, scalar_prefetch = 0 : i64, scratch_operands = 0 : i64, tpu.core_type = #tpu.core_type<tc>, window_params = [{transform_indices = @transform_0, window_bounds = array<i64: 1, 64, 32>}, {pipeline_mode = #tpu.pipeline_mode<synchronous>, transform_indices = @transform_1, window_bounds = array<i64: 4, 32, 96>}, {pipeline_mode = #tpu.pipeline_mode<synchronous>, transform_indices = @transform_2, window_bounds = array<i64: 4, 32, 32>}, {pipeline_mode = #tpu.pipeline_mode<synchronous>, transform_indices = @transform_3, window_bounds = array<i64: 4, 32, 64>}, {pipeline_mode = #tpu.pipeline_mode<synchronous>, transform_indices = @transform_4, window_bounds = array<i64: 4, 64, 32>}, {pipeline_mode = #tpu.pipeline_mode<synchronous>, transform_indices = @transform_5, window_bounds = array<i64: 4, 8, 96>}, {pipeline_mode = #tpu.pipeline_mode<synchronous>, transform_indices = @transform_6, window_bounds = array<i64: 32, 64>}, {pipeline_mode = #tpu.pipeline_mode<synchronous>, transform_indices = @transform_7, window_bounds = array<i64: 1, 64>}, {transform_indices = @transform_8, window_bounds = array<i64: 1, 1, 32>}, {transform_indices = @transform_9, window_bounds = array<i64: 1, 1, 32>}, {transform_indices = @transform_10, window_bounds = array<i64: 1, 1, 1>}]} {
    %c0 = arith.constant 0 : index
    %c0_0 = arith.constant 0 : index
    %c0_1 = arith.constant 0 : index
    %0 = vector.load %arg1[%c0, %c0_0, %c0_1] : memref<1x64x32xf32, #tpu.memory_space<vmem>>, vector<1x64x32xf32>
    %1 = vector.shape_cast %0 : vector<1x64x32xf32> to vector<64x32xf32>
    %c0_i32 = arith.constant 0 : i32
    %c4_i32 = arith.constant 4 : i32
    %2 = arith.addi %c0_i32, %c4_i32 : i32
    %c1_i32 = arith.constant 1 : i32
    %3 = scf.for %arg12 = %c0_i32 to %2 step %c1_i32 iter_args(%arg13 = %1) -> (vector<64x32xf32>)  : i32 {
      %25 = arith.index_cast %arg12 : i32 to index
      %c0_18 = arith.constant 0 : index
      %c0_19 = arith.constant 0 : index
      %26 = vector.load %arg2[%25, %c0_18, %c0_19] : memref<4x32x96xbf16, #tpu.memory_space<vmem>>, vector<1x32x96xbf16>
      %27 = vector.shape_cast %26 : vector<1x32x96xbf16> to vector<32x96xbf16>
      %28 = arith.index_cast %arg12 : i32 to index
      %c0_20 = arith.constant 0 : index
      %c0_21 = arith.constant 0 : index
      %29 = vector.load %arg3[%28, %c0_20, %c0_21] : memref<4x32x32xbf16, #tpu.memory_space<vmem>>, vector<1x32x32xbf16>
      %30 = vector.shape_cast %29 : vector<1x32x32xbf16> to vector<32x32xbf16>
      %31 = arith.index_cast %arg12 : i32 to index
      %c0_22 = arith.constant 0 : index
      %c0_23 = arith.constant 0 : index
      %32 = vector.load %arg4[%31, %c0_22, %c0_23] : memref<4x32x64xbf16, #tpu.memory_space<vmem>>, vector<1x32x64xbf16>
      %33 = vector.shape_cast %32 : vector<1x32x64xbf16> to vector<32x64xbf16>
      %34 = arith.index_cast %arg12 : i32 to index
      %c0_24 = arith.constant 0 : index
      %c0_25 = arith.constant 0 : index
      %35 = vector.load %arg5[%34, %c0_24, %c0_25] : memref<4x64x32xbf16, #tpu.memory_space<vmem>>, vector<1x64x32xbf16>
      %36 = vector.shape_cast %35 : vector<1x64x32xbf16> to vector<64x32xbf16>
      %37 = arith.index_cast %arg12 : i32 to index
      %c0_26 = arith.constant 0 : index
      %c0_27 = arith.constant 0 : index
      %38 = vector.load %arg6[%37, %c0_26, %c0_27] : memref<4x8x96xf32, #tpu.memory_space<vmem>>, vector<1x8x96xf32>
      %39 = vector.shape_cast %38 : vector<1x8x96xf32> to vector<8x96xf32>
      %40 = vector.extract_strided_slice %39 {offsets = [0, 0], sizes = [1, 96], strides = [1, 1]} : vector<8x96xf32> to vector<1x96xf32>
      %41 = vector.extract_strided_slice %39 {offsets = [1, 0], sizes = [1, 64], strides = [1, 1]} : vector<8x96xf32> to vector<1x64xf32>
      %42 = vector.extract_strided_slice %39 {offsets = [2, 0], sizes = [1, 32], strides = [1, 1]} : vector<8x96xf32> to vector<1x32xf32>
      %43 = vector.extract_strided_slice %39 {offsets = [3, 0], sizes = [1, 32], strides = [1, 1]} : vector<8x96xf32> to vector<1x32xf32>
      %44 = vector.extract_strided_slice %39 {offsets = [4, 0], sizes = [1, 32], strides = [1, 1]} : vector<8x96xf32> to vector<1x32xf32>
      %45 = vector.extract_strided_slice %39 {offsets = [5, 0], sizes = [1, 32], strides = [1, 1]} : vector<8x96xf32> to vector<1x32xf32>
      %46 = vector.extract_strided_slice %39 {offsets = [6, 0], sizes = [1, 32], strides = [1, 1]} : vector<8x96xf32> to vector<1x32xf32>
      %47 = vector.extract_strided_slice %39 {offsets = [7, 0], sizes = [1, 32], strides = [1, 1]} : vector<8x96xf32> to vector<1x32xf32>
      %48 = arith.truncf %arg13 : vector<64x32xf32> to vector<64x32xbf16>
      %cst_28 = arith.constant dense<0.000000e+00> : vector<64x96xf32>
      %49 = tpu.matmul %48, %27, %cst_28 {dimension_numbers = #tpu.dot_dimension_numbers<[1], [0], [0], [1], [0, 0, 1, 1], [], []>} : vector<64x32xbf16>, vector<32x96xbf16>, vector<64x96xf32> -> vector<64x96xf32>
      %50 = vector.broadcast %40 : vector<1x96xf32> to vector<64x96xf32>
      %51 = arith.addf %49, %50 : vector<64x96xf32>
      %52 = vector.extract_strided_slice %51 {offsets = [0, 0], sizes = [64, 8], strides = [1, 1]} : vector<64x96xf32> to vector<64x8xf32>
      %53 = vector.extract_strided_slice %51 {offsets = [0, 32], sizes = [64, 8], strides = [1, 1]} : vector<64x96xf32> to vector<64x8xf32>
      %54 = vector.extract_strided_slice %51 {offsets = [0, 64], sizes = [64, 8], strides = [1, 1]} : vector<64x96xf32> to vector<64x8xf32>
      %55 = arith.truncf %52 : vector<64x8xf32> to vector<64x8xbf16>
      %56 = arith.truncf %53 : vector<64x8xf32> to vector<64x8xbf16>
      %cst_29 = arith.constant dense<0.000000e+00> : vector<64x64xf32>
      %57 = tpu.matmul %55, %56, %cst_29 {dimension_numbers = #tpu.dot_dimension_numbers<[1], [1], [0], [0], [0, 0, 1, 0], [], []>} : vector<64x8xbf16>, vector<64x8xbf16>, vector<64x64xf32> -> vector<64x64xf32>
      %cst_30 = arith.constant dense<0xFF800000> : vector<64xf32>
      %58 = vector.multi_reduction <maximumf>, %57, %cst_30 [1] : vector<64x64xf32> to vector<64xf32>
      %59 = vector.shape_cast %58 : vector<64xf32> to vector<64x1xf32>
      %60 = vector.broadcast %59 : vector<64x1xf32> to vector<64x64xf32>
      %61 = arith.subf %57, %60 : vector<64x64xf32>
      %62 = math.exp %61 : vector<64x64xf32>
      %cst_31 = arith.constant dense<0.000000e+00> : vector<64xf32>
      %63 = vector.multi_reduction <add>, %62, %cst_31 [1] : vector<64x64xf32> to vector<64xf32>
      %64 = vector.shape_cast %63 : vector<64xf32> to vector<64x1xf32>
      %65 = tpu.reciprocal %64 {approx = true} : vector<64x1xf32> -> vector<64x1xf32>
      %66 = vector.broadcast %65 : vector<64x1xf32> to vector<64x64xf32>
      %67 = arith.mulf %62, %66 : vector<64x64xf32>
      %68 = arith.truncf %67 : vector<64x64xf32> to vector<64x64xbf16>
      %69 = arith.truncf %54 : vector<64x8xf32> to vector<64x8xbf16>
      %cst_32 = arith.constant dense<0.000000e+00> : vector<64x8xf32>
      %70 = tpu.matmul %68, %69, %cst_32 {dimension_numbers = #tpu.dot_dimension_numbers<[1], [0], [0], [1], [0, 0, 1, 1], [], []>} : vector<64x64xbf16>, vector<64x8xbf16>, vector<64x8xf32> -> vector<64x8xf32>
      %71 = vector.extract_strided_slice %51 {offsets = [0, 8], sizes = [64, 8], strides = [1, 1]} : vector<64x96xf32> to vector<64x8xf32>
      %72 = vector.extract_strided_slice %51 {offsets = [0, 40], sizes = [64, 8], strides = [1, 1]} : vector<64x96xf32> to vector<64x8xf32>
      %73 = vector.extract_strided_slice %51 {offsets = [0, 72], sizes = [64, 8], strides = [1, 1]} : vector<64x96xf32> to vector<64x8xf32>
      %74 = arith.truncf %71 : vector<64x8xf32> to vector<64x8xbf16>
      %75 = arith.truncf %72 : vector<64x8xf32> to vector<64x8xbf16>
      %cst_33 = arith.constant dense<0.000000e+00> : vector<64x64xf32>
      %76 = tpu.matmul %74, %75, %cst_33 {dimension_numbers = #tpu.dot_dimension_numbers<[1], [1], [0], [0], [0, 0, 1, 0], [], []>} : vector<64x8xbf16>, vector<64x8xbf16>, vector<64x64xf32> -> vector<64x64xf32>
      %cst_34 = arith.constant dense<0xFF800000> : vector<64xf32>
      %77 = vector.multi_reduction <maximumf>, %76, %cst_34 [1] : vector<64x64xf32> to vector<64xf32>
      %78 = vector.shape_cast %77 : vector<64xf32> to vector<64x1xf32>
      %79 = vector.broadcast %78 : vector<64x1xf32> to vector<64x64xf32>
      %80 = arith.subf %76, %79 : vector<64x64xf32>
      %81 = math.exp %80 : vector<64x64xf32>
      %cst_35 = arith.constant dense<0.000000e+00> : vector<64xf32>
      %82 = vector.multi_reduction <add>, %81, %cst_35 [1] : vector<64x64xf32> to vector<64xf32>
      %83 = vector.shape_cast %82 : vector<64xf32> to vector<64x1xf32>
      %84 = tpu.reciprocal %83 {approx = true} : vector<64x1xf32> -> vector<64x1xf32>
      %85 = vector.broadcast %84 : vector<64x1xf32> to vector<64x64xf32>
      %86 = arith.mulf %81, %85 : vector<64x64xf32>
      %87 = arith.truncf %86 : vector<64x64xf32> to vector<64x64xbf16>
      %88 = arith.truncf %73 : vector<64x8xf32> to vector<64x8xbf16>
      %cst_36 = arith.constant dense<0.000000e+00> : vector<64x8xf32>
      %89 = tpu.matmul %87, %88, %cst_36 {dimension_numbers = #tpu.dot_dimension_numbers<[1], [0], [0], [1], [0, 0, 1, 1], [], []>} : vector<64x64xbf16>, vector<64x8xbf16>, vector<64x8xf32> -> vector<64x8xf32>
      %90 = vector.extract_strided_slice %51 {offsets = [0, 16], sizes = [64, 8], strides = [1, 1]} : vector<64x96xf32> to vector<64x8xf32>
      %91 = vector.extract_strided_slice %51 {offsets = [0, 48], sizes = [64, 8], strides = [1, 1]} : vector<64x96xf32> to vector<64x8xf32>
      %92 = vector.extract_strided_slice %51 {offsets = [0, 80], sizes = [64, 8], strides = [1, 1]} : vector<64x96xf32> to vector<64x8xf32>
      %93 = arith.truncf %90 : vector<64x8xf32> to vector<64x8xbf16>
      %94 = arith.truncf %91 : vector<64x8xf32> to vector<64x8xbf16>
      %cst_37 = arith.constant dense<0.000000e+00> : vector<64x64xf32>
      %95 = tpu.matmul %93, %94, %cst_37 {dimension_numbers = #tpu.dot_dimension_numbers<[1], [1], [0], [0], [0, 0, 1, 0], [], []>} : vector<64x8xbf16>, vector<64x8xbf16>, vector<64x64xf32> -> vector<64x64xf32>
      %cst_38 = arith.constant dense<0xFF800000> : vector<64xf32>
      %96 = vector.multi_reduction <maximumf>, %95, %cst_38 [1] : vector<64x64xf32> to vector<64xf32>
      %97 = vector.shape_cast %96 : vector<64xf32> to vector<64x1xf32>
      %98 = vector.broadcast %97 : vector<64x1xf32> to vector<64x64xf32>
      %99 = arith.subf %95, %98 : vector<64x64xf32>
      %100 = math.exp %99 : vector<64x64xf32>
      %cst_39 = arith.constant dense<0.000000e+00> : vector<64xf32>
      %101 = vector.multi_reduction <add>, %100, %cst_39 [1] : vector<64x64xf32> to vector<64xf32>
      %102 = vector.shape_cast %101 : vector<64xf32> to vector<64x1xf32>
      %103 = tpu.reciprocal %102 {approx = true} : vector<64x1xf32> -> vector<64x1xf32>
      %104 = vector.broadcast %103 : vector<64x1xf32> to vector<64x64xf32>
      %105 = arith.mulf %100, %104 : vector<64x64xf32>
      %106 = arith.truncf %105 : vector<64x64xf32> to vector<64x64xbf16>
      %107 = arith.truncf %92 : vector<64x8xf32> to vector<64x8xbf16>
      %cst_40 = arith.constant dense<0.000000e+00> : vector<64x8xf32>
      %108 = tpu.matmul %106, %107, %cst_40 {dimension_numbers = #tpu.dot_dimension_numbers<[1], [0], [0], [1], [0, 0, 1, 1], [], []>} : vector<64x64xbf16>, vector<64x8xbf16>, vector<64x8xf32> -> vector<64x8xf32>
      %109 = vector.extract_strided_slice %51 {offsets = [0, 24], sizes = [64, 8], strides = [1, 1]} : vector<64x96xf32> to vector<64x8xf32>
      %110 = vector.extract_strided_slice %51 {offsets = [0, 56], sizes = [64, 8], strides = [1, 1]} : vector<64x96xf32> to vector<64x8xf32>
      %111 = vector.extract_strided_slice %51 {offsets = [0, 88], sizes = [64, 8], strides = [1, 1]} : vector<64x96xf32> to vector<64x8xf32>
      %112 = arith.truncf %109 : vector<64x8xf32> to vector<64x8xbf16>
      %113 = arith.truncf %110 : vector<64x8xf32> to vector<64x8xbf16>
      %cst_41 = arith.constant dense<0.000000e+00> : vector<64x64xf32>
      %114 = tpu.matmul %112, %113, %cst_41 {dimension_numbers = #tpu.dot_dimension_numbers<[1], [1], [0], [0], [0, 0, 1, 0], [], []>} : vector<64x8xbf16>, vector<64x8xbf16>, vector<64x64xf32> -> vector<64x64xf32>
      %cst_42 = arith.constant dense<0xFF800000> : vector<64xf32>
      %115 = vector.multi_reduction <maximumf>, %114, %cst_42 [1] : vector<64x64xf32> to vector<64xf32>
      %116 = vector.shape_cast %115 : vector<64xf32> to vector<64x1xf32>
      %117 = vector.broadcast %116 : vector<64x1xf32> to vector<64x64xf32>
      %118 = arith.subf %114, %117 : vector<64x64xf32>
      %119 = math.exp %118 : vector<64x64xf32>
      %cst_43 = arith.constant dense<0.000000e+00> : vector<64xf32>
      %120 = vector.multi_reduction <add>, %119, %cst_43 [1] : vector<64x64xf32> to vector<64xf32>
      %121 = vector.shape_cast %120 : vector<64xf32> to vector<64x1xf32>
      %122 = tpu.reciprocal %121 {approx = true} : vector<64x1xf32> -> vector<64x1xf32>
      %123 = vector.broadcast %122 : vector<64x1xf32> to vector<64x64xf32>
      %124 = arith.mulf %119, %123 : vector<64x64xf32>
      %125 = arith.truncf %124 : vector<64x64xf32> to vector<64x64xbf16>
      %126 = arith.truncf %111 : vector<64x8xf32> to vector<64x8xbf16>
      %cst_44 = arith.constant dense<0.000000e+00> : vector<64x8xf32>
      %127 = tpu.matmul %125, %126, %cst_44 {dimension_numbers = #tpu.dot_dimension_numbers<[1], [0], [0], [1], [0, 0, 1, 1], [], []>} : vector<64x64xbf16>, vector<64x8xbf16>, vector<64x8xf32> -> vector<64x8xf32>
      %128 = tpu.concatenate %70, %89, %108, %127 in 1 : vector<64x8xf32>, vector<64x8xf32>, vector<64x8xf32>, vector<64x8xf32> -> vector<64x32xf32>
      %129 = arith.truncf %128 : vector<64x32xf32> to vector<64x32xbf16>
      %cst_45 = arith.constant dense<0.000000e+00> : vector<64x32xf32>
      %130 = tpu.matmul %129, %30, %cst_45 {dimension_numbers = #tpu.dot_dimension_numbers<[1], [0], [0], [1], [0, 0, 1, 1], [], []>} : vector<64x32xbf16>, vector<32x32xbf16>, vector<64x32xf32> -> vector<64x32xf32>
      %131 = vector.broadcast %42 : vector<1x32xf32> to vector<64x32xf32>
      %132 = arith.addf %130, %131 : vector<64x32xf32>
      %133 = arith.addf %arg13, %132 : vector<64x32xf32>
      %cst_46 = arith.constant dense<0.000000e+00> : vector<64xf32>
      %134 = vector.multi_reduction <add>, %133, %cst_46 [1] : vector<64x32xf32> to vector<64xf32>
      %135 = vector.shape_cast %134 : vector<64xf32> to vector<64x1xf32>
      %cst_47 = arith.constant 3.200000e+01 : f32
      %136 = vector.broadcast %cst_47 : f32 to vector<64x1xf32>
      %137 = arith.divf %135, %136 : vector<64x1xf32>
      %138 = vector.broadcast %137 : vector<64x1xf32> to vector<64x32xf32>
      %139 = arith.subf %133, %138 : vector<64x32xf32>
      %140 = arith.mulf %139, %139 : vector<64x32xf32>
      %cst_48 = arith.constant dense<0.000000e+00> : vector<64xf32>
      %141 = vector.multi_reduction <add>, %140, %cst_48 [1] : vector<64x32xf32> to vector<64xf32>
      %142 = vector.shape_cast %141 : vector<64xf32> to vector<64x1xf32>
      %cst_49 = arith.constant 3.200000e+01 : f32
      %143 = vector.broadcast %cst_49 : f32 to vector<64x1xf32>
      %144 = arith.divf %142, %143 : vector<64x1xf32>
      %145 = vector.broadcast %137 : vector<64x1xf32> to vector<64x32xf32>
      %146 = arith.subf %133, %145 : vector<64x32xf32>
      %cst_50 = arith.constant 9.99999974E-6 : f32
      %147 = vector.broadcast %cst_50 : f32 to vector<64x1xf32>
      %148 = arith.addf %144, %147 : vector<64x1xf32>
      %149 = math.rsqrt %148 : vector<64x1xf32>
      %150 = vector.broadcast %149 : vector<64x1xf32> to vector<64x32xf32>
      %151 = arith.mulf %146, %150 : vector<64x32xf32>
      %152 = vector.broadcast %43 : vector<1x32xf32> to vector<64x32xf32>
      %153 = arith.mulf %151, %152 : vector<64x32xf32>
      %154 = vector.broadcast %44 : vector<1x32xf32> to vector<64x32xf32>
      %155 = arith.addf %153, %154 : vector<64x32xf32>
      %156 = arith.truncf %155 : vector<64x32xf32> to vector<64x32xbf16>
      %cst_51 = arith.constant dense<0.000000e+00> : vector<64x64xf32>
      %157 = tpu.matmul %156, %33, %cst_51 {dimension_numbers = #tpu.dot_dimension_numbers<[1], [0], [0], [1], [0, 0, 1, 1], [], []>} : vector<64x32xbf16>, vector<32x64xbf16>, vector<64x64xf32> -> vector<64x64xf32>
      %158 = vector.broadcast %41 : vector<1x64xf32> to vector<64x64xf32>
      %159 = arith.addf %157, %158 : vector<64x64xf32>
      %cst_52 = arith.constant 0.000000e+00 : f32
      %160 = vector.broadcast %cst_52 : f32 to vector<64x64xf32>
      %161 = arith.maximumf %159, %160 : vector<64x64xf32>
      %162 = arith.truncf %161 : vector<64x64xf32> to vector<64x64xbf16>
      %cst_53 = arith.constant dense<0.000000e+00> : vector<64x32xf32>
      %163 = tpu.matmul %162, %36, %cst_53 {dimension_numbers = #tpu.dot_dimension_numbers<[1], [0], [0], [1], [0, 0, 1, 1], [], []>} : vector<64x64xbf16>, vector<64x32xbf16>, vector<64x32xf32> -> vector<64x32xf32>
      %164 = vector.broadcast %47 : vector<1x32xf32> to vector<64x32xf32>
      %165 = arith.addf %163, %164 : vector<64x32xf32>
      %166 = arith.addf %155, %165 : vector<64x32xf32>
      %cst_54 = arith.constant dense<0.000000e+00> : vector<64xf32>
      %167 = vector.multi_reduction <add>, %166, %cst_54 [1] : vector<64x32xf32> to vector<64xf32>
      %168 = vector.shape_cast %167 : vector<64xf32> to vector<64x1xf32>
      %cst_55 = arith.constant 3.200000e+01 : f32
      %169 = vector.broadcast %cst_55 : f32 to vector<64x1xf32>
      %170 = arith.divf %168, %169 : vector<64x1xf32>
      %171 = vector.broadcast %170 : vector<64x1xf32> to vector<64x32xf32>
      %172 = arith.subf %166, %171 : vector<64x32xf32>
      %173 = arith.mulf %172, %172 : vector<64x32xf32>
      %cst_56 = arith.constant dense<0.000000e+00> : vector<64xf32>
      %174 = vector.multi_reduction <add>, %173, %cst_56 [1] : vector<64x32xf32> to vector<64xf32>
      %175 = vector.shape_cast %174 : vector<64xf32> to vector<64x1xf32>
      %cst_57 = arith.constant 3.200000e+01 : f32
      %176 = vector.broadcast %cst_57 : f32 to vector<64x1xf32>
      %177 = arith.divf %175, %176 : vector<64x1xf32>
      %178 = vector.broadcast %170 : vector<64x1xf32> to vector<64x32xf32>
      %179 = arith.subf %166, %178 : vector<64x32xf32>
      %cst_58 = arith.constant 9.99999974E-6 : f32
      %180 = vector.broadcast %cst_58 : f32 to vector<64x1xf32>
      %181 = arith.addf %177, %180 : vector<64x1xf32>
      %182 = math.rsqrt %181 : vector<64x1xf32>
      %183 = vector.broadcast %182 : vector<64x1xf32> to vector<64x32xf32>
      %184 = arith.mulf %179, %183 : vector<64x32xf32>
      %185 = vector.broadcast %45 : vector<1x32xf32> to vector<64x32xf32>
      %186 = arith.mulf %184, %185 : vector<64x32xf32>
      %187 = vector.broadcast %46 : vector<1x32xf32> to vector<64x32xf32>
      %188 = arith.addf %186, %187 : vector<64x32xf32>
      scf.yield %188 : vector<64x32xf32>
    }
    %c4_i32_2 = arith.constant 4 : i32
    %cst = arith.constant dense<0xFF800000> : vector<32xf32>
    %4 = vector.multi_reduction <maximumf>, %3, %cst [0] : vector<64x32xf32> to vector<32xf32>
    %5 = vector.shape_cast %4 : vector<32xf32> to vector<1x32xf32>
    %6 = arith.truncf %5 : vector<1x32xf32> to vector<1x32xbf16>
    %c0_3 = arith.constant 0 : index
    %c0_4 = arith.constant 0 : index
    %7 = vector.load %arg7[%c0_3, %c0_4] : memref<32x64xbf16, #tpu.memory_space<vmem>>, vector<32x64xbf16>
    %cst_5 = arith.constant dense<0.000000e+00> : vector<1x64xf32>
    %8 = tpu.matmul %6, %7, %cst_5 {dimension_numbers = #tpu.dot_dimension_numbers<[1], [0], [0], [1], [0, 0, 1, 1], [], []>} : vector<1x32xbf16>, vector<32x64xbf16>, vector<1x64xf32> -> vector<1x64xf32>
    %c0_6 = arith.constant 0 : index
    %c0_7 = arith.constant 0 : index
    %9 = vector.load %arg8[%c0_6, %c0_7] : memref<1x64xf32, #tpu.memory_space<vmem>>, vector<1x64xf32>
    %10 = arith.addf %8, %9 : vector<1x64xf32>
    %11 = vector.extract_strided_slice %10 {offsets = [0, 0], sizes = [1, 32], strides = [1, 1]} : vector<1x64xf32> to vector<1x32xf32>
    %12 = vector.extract_strided_slice %10 {offsets = [0, 32], sizes = [1, 32], strides = [1, 1]} : vector<1x64xf32> to vector<1x32xf32>
    %c0_8 = arith.constant 0 : index
    %c0_9 = arith.constant 0 : index
    %c0_10 = arith.constant 0 : index
    %13 = vector.load %arg9[%c0_8, %c0_9, %c0_10] : memref<1x1x32xf32, #tpu.memory_space<vmem>>, vector<1x1x32xf32>
    %14 = vector.shape_cast %13 : vector<1x1x32xf32> to vector<1x32xf32>
    %15 = vector.shape_cast %11 : vector<1x32xf32> to vector<1x1x32xf32>
    tpu.vector_store %arg9[%c0_8, %c0_9, %c0_10], %15 {strides = array<i32>} : memref<1x1x32xf32, #tpu.memory_space<vmem>>, vector<1x1x32xf32>,
    %c0_11 = arith.constant 0 : index
    %c0_12 = arith.constant 0 : index
    %c0_13 = arith.constant 0 : index
    %16 = vector.load %arg10[%c0_11, %c0_12, %c0_13] : memref<1x1x32xf32, #tpu.memory_space<vmem>>, vector<1x1x32xf32>
    %17 = vector.shape_cast %16 : vector<1x1x32xf32> to vector<1x32xf32>
    %18 = vector.shape_cast %12 : vector<1x32xf32> to vector<1x1x32xf32>
    tpu.vector_store %arg10[%c0_11, %c0_12, %c0_13], %18 {strides = array<i32>} : memref<1x1x32xf32, #tpu.memory_space<vmem>>, vector<1x1x32xf32>,
    %19 = arith.mulf %11, %12 : vector<1x32xf32>
    %cst_14 = arith.constant dense<0.000000e+00> : vector<1xf32>
    %20 = vector.multi_reduction <add>, %19, %cst_14 [1] : vector<1x32xf32> to vector<1xf32>
    %21 = vector.shape_cast %20 : vector<1xf32> to vector<1x1xf32>
    %c0_15 = arith.constant 0 : index
    %c0_16 = arith.constant 0 : index
    %c0_17 = arith.constant 0 : index
    %22 = vector.load %arg11[%c0_15, %c0_16, %c0_17] : memref<1x1x1xf32, #tpu.memory_space<vmem>>, vector<1x1x1xf32>
    %23 = vector.shape_cast %22 : vector<1x1x1xf32> to vector<1x1xf32>
    %24 = vector.shape_cast %21 : vector<1x1xf32> to vector<1x1x1xf32>
    tpu.vector_store %arg11[%c0_15, %c0_16, %c0_17], %24 {strides = array<i32>} : memref<1x1x1xf32, #tpu.memory_space<vmem>>, vector<1x1x1xf32>,
    return
  }
  func.func @transform_0(%arg0: i32) -> (i32, i32, i32) {
    %c0_i32 = arith.constant 0 : i32
    %c0_i32_0 = arith.constant 0 : i32
    %c0_i32_1 = arith.constant 0 : i32
    return %arg0, %c0_i32, %c0_i32_0 : i32, i32, i32
  }
  func.func @transform_1(%arg0: i32) -> (i32, i32, i32) {
    %c0_i32 = arith.constant 0 : i32
    %c0_i32_0 = arith.constant 0 : i32
    %c0_i32_1 = arith.constant 0 : i32
    %c0_i32_2 = arith.constant 0 : i32
    return %c0_i32, %c0_i32_0, %c0_i32_1 : i32, i32, i32
  }
  func.func @transform_2(%arg0: i32) -> (i32, i32, i32) {
    %c0_i32 = arith.constant 0 : i32
    %c0_i32_0 = arith.constant 0 : i32
    %c0_i32_1 = arith.constant 0 : i32
    %c0_i32_2 = arith.constant 0 : i32
    return %c0_i32, %c0_i32_0, %c0_i32_1 : i32, i32, i32
  }
  func.func @transform_3(%arg0: i32) -> (i32, i32, i32) {
    %c0_i32 = arith.constant 0 : i32
    %c0_i32_0 = arith.constant 0 : i32
    %c0_i32_1 = arith.constant 0 : i32
    %c0_i32_2 = arith.constant 0 : i32
    return %c0_i32, %c0_i32_0, %c0_i32_1 : i32, i32, i32
  }
  func.func @transform_4(%arg0: i32) -> (i32, i32, i32) {
    %c0_i32 = arith.constant 0 : i32
    %c0_i32_0 = arith.constant 0 : i32
    %c0_i32_1 = arith.constant 0 : i32
    %c0_i32_2 = arith.constant 0 : i32
    return %c0_i32, %c0_i32_0, %c0_i32_1 : i32, i32, i32
  }
  func.func @transform_5(%arg0: i32) -> (i32, i32, i32) {
    %c0_i32 = arith.constant 0 : i32
    %c0_i32_0 = arith.constant 0 : i32
    %c0_i32_1 = arith.constant 0 : i32
    %c0_i32_2 = arith.constant 0 : i32
    return %c0_i32, %c0_i32_0, %c0_i32_1 : i32, i32, i32
  }
  func.func @transform_6(%arg0: i32) -> (i32, i32) {
    %c0_i32 = arith.constant 0 : i32
    %c0_i32_0 = arith.constant 0 : i32
    %c0_i32_1 = arith.constant 0 : i32
    return %c0_i32, %c0_i32_0 : i32, i32
  }
  func.func @transform_7(%arg0: i32) -> (i32, i32) {
    %c0_i32 = arith.constant 0 : i32
    %c0_i32_0 = arith.constant 0 : i32
    %c0_i32_1 = arith.constant 0 : i32
    return %c0_i32, %c0_i32_0 : i32, i32
  }
  func.func @transform_8(%arg0: i32) -> (i32, i32, i32) {
    %c0_i32 = arith.constant 0 : i32
    %c0_i32_0 = arith.constant 0 : i32
    %c0_i32_1 = arith.constant 0 : i32
    return %arg0, %c0_i32, %c0_i32_0 : i32, i32, i32
  }
  func.func @transform_9(%arg0: i32) -> (i32, i32, i32) {
    %c0_i32 = arith.constant 0 : i32
    %c0_i32_0 = arith.constant 0 : i32
    %c0_i32_1 = arith.constant 0 : i32
    return %arg0, %c0_i32, %c0_i32_0 : i32, i32, i32
  }
  func.func @transform_10(%arg0: i32) -> (i32, i32, i32) {
    %c0_i32 = arith.constant 0 : i32
    %c0_i32_0 = arith.constant 0 : i32
    %c0_i32_1 = arith.constant 0 : i32
    return %arg0, %c0_i32, %c0_i32_0 : i32, i32, i32
  }
}

</mosaic_0001>

<llo_original>
// kernel: transformer_forward.1
$region0: #{transformer_forward.1}
  #allocation0 [shape = 'u32[]', space=smem, size = 0x4, offset = 0x4, fixed_abs, tag = 'smem constant byte address 0x4 - core index']
  #allocation1 [shape = 'u32[144,128]{1,0:T(1,128)}', space=vmem, size = 0x12000, scoped, tag = 'internal scratch']
  %s0 = inlined_call_operand.vmem [shape: f32[2,64,32], index: 0, kind: input, shape index: {}]
  %s1 = inlined_call_operand.vmem [shape: bf16[4,32,96], index: 1, kind: input, shape index: {}]
  %s2 = inlined_call_operand.vmem [shape: bf16[4,32,32], index: 2, kind: input, shape index: {}]
  %s3 = inlined_call_operand.vmem [shape: bf16[4,32,64], index: 3, kind: input, shape index: {}]
  %s4 = inlined_call_operand.vmem [shape: bf16[4,64,32], index: 4, kind: input, shape index: {}]
  %s5 = inlined_call_operand.vmem [shape: f32[4,8,96], index: 5, kind: input, shape index: {}]
  %s6 = inlined_call_operand.vmem [shape: bf16[32,64], index: 6, kind: input, shape index: {}]
  %s7 = inlined_call_operand.vmem [shape: f32[1,64], index: 7, kind: input, shape index: {}]
  %s8 = inlined_call_operand.hbm [shape: f32[2,1,32], index: 8, kind: output, shape index: {0}]
  %s9 = inlined_call_operand.hbm [shape: f32[2,1,32], index: 9, kind: output, shape index: {1}]
  %s10 = inlined_call_operand.vmem [shape: f32[2,1,1], index: 10, kind: output, shape index: {2}]
  %11 = xla_tuple %s8, %s9, %s10
  %s12 = sld [smem:[#allocation0]]
  $region88: #{transformer_forward.1} parent=0
    _
  %s14 = ssub.s32 1, %s12
  %s15 = scalar_select 0, %s14, %s12
  $region1: #{transformer_forward.1} parent=0
    #allocation2 [shape = 'u8[1024]{0}', space=vmem, size = 0x400, scoped, tag = 'output window, operand 0']
    #allocation3 [shape = 's32[2]{0}', space=sflag, size = 0x8, scoped, tag = 'scoped memory for transformer_forward.1']
    #allocation4 [shape = 'u8[1024]{0}', space=vmem, size = 0x400, scoped, tag = 'output window, operand 1']
    #allocation5 [shape = 's32[2]{0}', space=sflag, size = 0x8, scoped, tag = 'scoped memory for transformer_forward.1']
    %16 = vsyncpa [#allocation3], 0
    %s17 = scalar_lea.sflag [#allocation3], 1
    %18 = vsyncpa %s17, 0
    %19 = vsyncpa [#allocation5], 0
    %s20 = scalar_lea.sflag [#allocation5], 1
    %21 = vsyncpa %s20, 0
    loop: start=0, step=1, limit=4
    $region2: #{transformer_forward.1} parent=1 // loop_pre_header
      _
    $region3: #{transformer_forward.1} parent=1 // loop_header
      %s23 = sphi 0, %s27
      %p24 = scmp.ge.s32.totalorder %s23, 4
      %s33 = sphi 0, %s35
      %s36 = sphi 0, %s33
      %s37 = sphi 0, %s36
      %s53 = sphi 0, %s37
      %s57 = sphi 0, %s57
      %s59 = sphi 0, %s57
      %s60 = sphi 0, %s59
      %s74 = sphi 0, %s60
      %s78 = sphi 0, %s78
      %s80 = sphi 0, %s78
      %s81 = sphi 0, %s80
      %s95 = sphi 0, %s81
      %s99 = sphi 0, %s99
      %s101 = sphi 0, %s99
      %s102 = sphi 0, %s101
      %s116 = sphi 0, %s102
      %s120 = sphi 0, %s120
      %s122 = sphi 0, %s120
      %s123 = sphi 0, %s122
      %s137 = sphi 0, %s123
      %s141 = sphi 0, %s141
      %s143 = sphi 0, %s141
      %s144 = sphi 0, %s143
      %s158 = sphi 0, %s144
      %s162 = sphi 0, %s162
      %s164 = sphi 0, %s162
      %s165 = sphi 0, %s164
      %s179 = sphi 0, %s165
      %s183 = sphi 0, %s183
      %s185 = sphi 0, %s183
      %s186 = sphi 0, %s185
      %s200 = sphi 0, %s186
      %s206 = sphi 0, %s208
      %s209 = sphi 0, %s206
      %s210 = sphi 0, %s209
      %s226 = sphi 0, %s210
      %s232 = sphi 0, %s234
      %s235 = sphi 0, %s232
      %s236 = sphi 0, %s235
      %s252 = sphi 0, %s236
      %s258 = sphi 0, %s260
      %s261 = sphi 0, %s258
      %s262 = sphi 0, %s261
      %s278 = sphi 0, %s262
    $region4: #{transformer_forward.1} parent=1 // loop_header_branch
      %26 = sbr.rel (%p24) target = $region8
    $region5: #{transformer_forward.1} parent=1 // loop_body
      %s28 = ssub.s32 %s23, 1
      %s29 = ssub.s32 %s23, 2
      %s30 = sadd.s32 %s23, 1
      %s31 = ssub.s32 %s23, %s30
      %p32 = scmp.eq.s32.totalorder %s31, 0
      %s34 = sadd.s32 %s33, 1
      %s35 = scalar_select %p32, %s33, %s34
      %p38 = pneg %p32
      %p39 = scmp.eq.s32.totalorder %s23, 1
      %p40 = por %p38, %p39
      %p41 = scmp.ne.s32.totalorder %s33, %s36
      %p42 = scmp.eq.s32.totalorder %s23, 0
      %p43 = por %p41, %p42
      %p44 = scmp.ne.s32.totalorder %s33, %s36
      %p45 = scmp.eq.s32.totalorder %s28, 1
      %p46 = por %p44, %p45
      %p47 = scmp.ne.s32.totalorder %s36, %s37
      %p48 = scmp.eq.s32.totalorder %s28, 0
      %p49 = por %p47, %p48
      %p50 = scmp.ne.s32.totalorder %s36, %s37
      %p51 = scmp.eq.s32.totalorder %s29, 1
      %p52 = por %p50, %p51
      %p54 = scmp.ne.s32.totalorder %s37, %s53
      %p55 = scmp.eq.s32.totalorder %s29, 0
      %p56 = por %p54, %p55
      %s58 = sadd.s32 %s57, 1
      %p61 = scmp.eq.s32.totalorder %s23, 1
      %p62 = scmp.ne.s32.totalorder %s57, %s59
      %p63 = scmp.eq.s32.totalorder %s23, 0
      %p64 = por %p62, %p63
      %p65 = scmp.ne.s32.totalorder %s57, %s59
      %p66 = scmp.eq.s32.totalorder %s28, 1
      %p67 = por %p65, %p66
      %p68 = scmp.ne.s32.totalorder %s59, %s60
      %p69 = scmp.eq.s32.totalorder %s28, 0
      %p70 = por %p68, %p69
      %p71 = scmp.ne.s32.totalorder %s59, %s60
      %p72 = scmp.eq.s32.totalorder %s29, 1
      %p73 = por %p71, %p72
      %p75 = scmp.ne.s32.totalorder %s60, %s74
      %p76 = scmp.eq.s32.totalorder %s29, 0
      %p77 = por %p75, %p76
      %s79 = sadd.s32 %s78, 1
      %p82 = scmp.eq.s32.totalorder %s23, 1
      %p83 = scmp.ne.s32.totalorder %s78, %s80
      %p84 = scmp.eq.s32.totalorder %s23, 0
      %p85 = por %p83, %p84
      %p86 = scmp.ne.s32.totalorder %s78, %s80
      %p87 = scmp.eq.s32.totalorder %s28, 1
      %p88 = por %p86, %p87
      %p89 = scmp.ne.s32.totalorder %s80, %s81
      %p90 = scmp.eq.s32.totalorder %s28, 0
      %p91 = por %p89, %p90
      %p92 = scmp.ne.s32.totalorder %s80, %s81
      %p93 = scmp.eq.s32.totalorder %s29, 1
      %p94 = por %p92, %p93
      %p96 = scmp.ne.s32.totalorder %s81, %s95
      %p97 = scmp.eq.s32.totalorder %s29, 0
      %p98 = por %p96, %p97
      %s100 = sadd.s32 %s99, 1
      %p103 = scmp.eq.s32.totalorder %s23, 1
      %p104 = scmp.ne.s32.totalorder %s99, %s101
      %p105 = scmp.eq.s32.totalorder %s23, 0
      %p106 = por %p104, %p105
      %p107 = scmp.ne.s32.totalorder %s99, %s101
      %p108 = scmp.eq.s32.totalorder %s28, 1
      %p109 = por %p107, %p108
      %p110 = scmp.ne.s32.totalorder %s101, %s102
      %p111 = scmp.eq.s32.totalorder %s28, 0
      %p112 = por %p110, %p111
      %p113 = scmp.ne.s32.totalorder %s101, %s102
      %p114 = scmp.eq.s32.totalorder %s29, 1
      %p115 = por %p113, %p114
      %p117 = scmp.ne.s32.totalorder %s102, %s116
      %p118 = scmp.eq.s32.totalorder %s29, 0
      %p119 = por %p117, %p118
      %s121 = sadd.s32 %s120, 1
      %p124 = scmp.eq.s32.totalorder %s23, 1
      %p125 = scmp.ne.s32.totalorder %s120, %s122
      %p126 = scmp.eq.s32.totalorder %s23, 0
      %p127 = por %p125, %p126
      %p128 = scmp.ne.s32.totalorder %s120, %s122
      %p129 = scmp.eq.s32.totalorder %s28, 1
      %p130 = por %p128, %p129
      %p131 = scmp.ne.s32.totalorder %s122, %s123
      %p132 = scmp.eq.s32.totalorder %s28, 0
      %p133 = por %p131, %p132
      %p134 = scmp.ne.s32.totalorder %s122, %s123
      %p135 = scmp.eq.s32.totalorder %s29, 1
      %p136 = por %p134, %p135
      %p138 = scmp.ne.s32.totalorder %s123, %s137
      %p139 = scmp.eq.s32.totalorder %s29, 0
      %p140 = por %p138, %p139
      %s142 = sadd.s32 %s141, 1
      %p145 = scmp.eq.s32.totalorder %s23, 1
      %p146 = scmp.ne.s32.totalorder %s141, %s143
      %p147 = scmp.eq.s32.totalorder %s23, 0
      %p148 = por %p146, %p147
      %p149 = scmp.ne.s32.totalorder %s141, %s143
      %p150 = scmp.eq.s32.totalorder %s28, 1
      %p151 = por %p149, %p150
      %p152 = scmp.ne.s32.totalorder %s143, %s144
      %p153 = scmp.eq.s32.totalorder %s28, 0
      %p154 = por %p152, %p153
      %p155 = scmp.ne.s32.totalorder %s143, %s144
      %p156 = scmp.eq.s32.totalorder %s29, 1
      %p157 = por %p155, %p156
      %p159 = scmp.ne.s32.totalorder %s144, %s158
      %p160 = scmp.eq.s32.totalorder %s29, 0
      %p161 = por %p159, %p160
      %s163 = sadd.s32 %s162, 1
      %p166 = scmp.eq.s32.totalorder %s23, 1
      %p167 = scmp.ne.s32.totalorder %s162, %s164
      %p168 = scmp.eq.s32.totalorder %s23, 0
      %p169 = por %p167, %p168
      %p170 = scmp.ne.s32.totalorder %s162, %s164
      %p171 = scmp.eq.s32.totalorder %s28, 1
      %p172 = por %p170, %p171
      %p173 = scmp.ne.s32.totalorder %s164, %s165
      %p174 = scmp.eq.s32.totalorder %s28, 0
      %p175 = por %p173, %p174
      %p176 = scmp.ne.s32.totalorder %s164, %s165
      %p177 = scmp.eq.s32.totalorder %s29, 1
      %p178 = por %p176, %p177
      %p180 = scmp.ne.s32.totalorder %s165, %s179
      %p181 = scmp.eq.s32.totalorder %s29, 0
      %p182 = por %p180, %p181
      %s184 = sadd.s32 %s183, 1
      %p187 = scmp.eq.s32.totalorder %s23, 1
      %p188 = scmp.ne.s32.totalorder %s183, %s185
      %p189 = scmp.eq.s32.totalorder %s23, 0
      %p190 = por %p188, %p189
      %p191 = scmp.ne.s32.totalorder %s183, %s185
      %p192 = scmp.eq.s32.totalorder %s28, 1
      %p193 = por %p191, %p192
      %p194 = scmp.ne.s32.totalorder %s185, %s186
      %p195 = scmp.eq.s32.totalorder %s28, 0
      %p196 = por %p194, %p195
      %p197 = scmp.ne.s32.totalorder %s185, %s186
      %p198 = scmp.eq.s32.totalorder %s29, 1
      %p199 = por %p197, %p198
      %p201 = scmp.ne.s32.totalorder %s186, %s200
      %p202 = scmp.eq.s32.totalorder %s29, 0
      %p203 = por %p201, %p202
      %s204 = ssub.s32 %s23, %s30
      %p205 = scmp.eq.s32.totalorder %s204, 0
      %s207 = sadd.s32 %s206, 1
      %s208 = scalar_select %p205, %s206, %s207
      %p211 = pneg %p205
      %p212 = scmp.eq.s32.totalorder %s23, 1
      %p213 = por %p211, %p212
      %p214 = scmp.ne.s32.totalorder %s206, %s209
      %p215 = scmp.eq.s32.totalorder %s23, 0
      %p216 = por %p214, %p215
      %p217 = scmp.ne.s32.totalorder %s206, %s209
      %p218 = scmp.eq.s32.totalorder %s28, 1
      %p219 = por %p217, %p218
      %p220 = scmp.ne.s32.totalorder %s209, %s210
      %p221 = scmp.eq.s32.totalorder %s28, 0
      %p222 = por %p220, %p221
      %p223 = scmp.ne.s32.totalorder %s209, %s210
      %p224 = scmp.eq.s32.totalorder %s29, 1
      %p225 = por %p223, %p224
      %p227 = scmp.ne.s32.totalorder %s210, %s226
      %p228 = scmp.eq.s32.totalorder %s29, 0
      %p229 = por %p227, %p228
      %s230 = ssub.s32 %s23, %s30
      %p231 = scmp.eq.s32.totalorder %s230, 0
      %s233 = sadd.s32 %s232, 1
      %s234 = scalar_select %p231, %s232, %s233
      %p237 = pneg %p231
      %p238 = scmp.eq.s32.totalorder %s23, 1
      %p239 = por %p237, %p238
      %p240 = scmp.ne.s32.totalorder %s232, %s235
      %p241 = scmp.eq.s32.totalorder %s23, 0
      %p242 = por %p240, %p241
      %p243 = scmp.ne.s32.totalorder %s232, %s235
      %p244 = scmp.eq.s32.totalorder %s28, 1
      %p245 = por %p243, %p244
      %p246 = scmp.ne.s32.totalorder %s235, %s236
      %p247 = scmp.eq.s32.totalorder %s28, 0
      %p248 = por %p246, %p247
      %p249 = scmp.ne.s32.totalorder %s235, %s236
      %p250 = scmp.eq.s32.totalorder %s29, 1
      %p251 = por %p249, %p250
      %p253 = scmp.ne.s32.totalorder %s236, %s252
      %p254 = scmp.eq.s32.totalorder %s29, 0
      %p255 = por %p253, %p254
      %s256 = ssub.s32 %s23, %s30
      %p257 = scmp.eq.s32.totalorder %s256, 0
      %s259 = sadd.s32 %s258, 1
      %s260 = scalar_select %p257, %s258, %s259
      %p263 = pneg %p257
      %p264 = scmp.eq.s32.totalorder %s23, 1
      %p265 = por %p263, %p264
      %p266 = scmp.ne.s32.totalorder %s258, %s261
      %p267 = scmp.eq.s32.totalorder %s23, 0
      %p268 = por %p266, %p267
      %p269 = scmp.ne.s32.totalorder %s258, %s261
      %p270 = scmp.eq.s32.totalorder %s28, 1
      %p271 = por %p269, %p270
      %p272 = scmp.ne.s32.totalorder %s261, %s262
      %p273 = scmp.eq.s32.totalorder %s28, 0
      %p274 = por %p272, %p273
      %p275 = scmp.ne.s32.totalorder %s261, %s262
      %p276 = scmp.eq.s32.totalorder %s29, 1
      %p277 = por %p275, %p276
      %p279 = scmp.ne.s32.totalorder %s262, %s278
      %p280 = scmp.eq.s32.totalorder %s29, 0
      %p281 = por %p279, %p280
      %p282 = scmp.le.s32.totalorder 1, %s23
      %p283 = scmp.lt.s32.totalorder %s23, 3
      %p284 = pnand %p282, %p283
      %p285 = pneg %p284
      // Predicated region
      $region9: #{transformer_forward.1} parent=5 // pred_check
        _
      $region10: #{transformer_forward.1} parent=5 // pred_check_branch
        %287 = sbr.rel (%p284) target = $region12
      $region11: #{transformer_forward.1} parent=5 // pred_region
        %s288 = ssub.s32 %s23, 1
        // Predicated region
        $region13: #{transformer_forward.1} parent=11 // pred_check
          %p289 = pneg %p70
        $region14: #{transformer_forward.1} parent=11 // pred_check_branch
          %291 = sbr.rel (%p289) target = $region16
        $region15: #{transformer_forward.1} parent=11 // pred_region
          _
        $region16: #{transformer_forward.1} parent=11 // pred_fallthru
          _
        // Predicated region
        $region17: #{transformer_forward.1} parent=11 // pred_check
          %p292 = pneg %p91
        $region18: #{transformer_forward.1} parent=11 // pred_check_branch
          %294 = sbr.rel (%p292) target = $region20
        $region19: #{transformer_forward.1} parent=11 // pred_region
          _
        $region20: #{transformer_forward.1} parent=11 // pred_fallthru
          _
        // Predicated region
        $region21: #{transformer_forward.1} parent=11 // pred_check
          %p295 = pneg %p112
        $region22: #{transformer_forward.1} parent=11 // pred_check_branch
          %297 = sbr.rel (%p295) target = $region24
        $region23: #{transformer_forward.1} parent=11 // pred_region
          _
        $region24: #{transformer_forward.1} parent=11 // pred_fallthru
          _
        // Predicated region
        $region25: #{transformer_forward.1} parent=11 // pred_check
          %p298 = pneg %p133
        $region26: #{transformer_forward.1} parent=11 // pred_check_branch
          %300 = sbr.rel (%p298) target = $region28
        $region27: #{transformer_forward.1} parent=11 // pred_region
          _
        $region28: #{transformer_forward.1} parent=11 // pred_fallthru
          _
        // Predicated region
        $region29: #{transformer_forward.1} parent=11 // pred_check
          %p301 = pneg %p154
        $region30: #{transformer_forward.1} parent=11 // pred_check_branch
          %303 = sbr.rel (%p301) target = $region32
        $region31: #{transformer_forward.1} parent=11 // pred_region
          _
        $region32: #{transformer_forward.1} parent=11 // pred_fallthru
          _
        // Predicated region
        $region33: #{transformer_forward.1} parent=11 // pred_check
          %p304 = pneg %p175
        $region34: #{transformer_forward.1} parent=11 // pred_check_branch
          %306 = sbr.rel (%p304) target = $region36
        $region35: #{transformer_forward.1} parent=11 // pred_region
          _
        $region36: #{transformer_forward.1} parent=11 // pred_fallthru
          _
        // Predicated region
        $region37: #{transformer_forward.1} parent=11 // pred_check
          %p307 = pneg %p196
        $region38: #{transformer_forward.1} parent=11 // pred_check_branch
          %309 = sbr.rel (%p307) target = $region40
        $region39: #{transformer_forward.1} parent=11 // pred_region
          _
        $region40: #{transformer_forward.1} parent=11 // pred_fallthru
          _
      $region12: #{transformer_forward.1} parent=5 // pred_fallthru
        _
      %p310 = scmp.lt.s32.totalorder %s23, 2
      // Predicated region
      $region41: #{transformer_forward.1} parent=5 // pred_check
        %p311 = pneg %p310
      $region42: #{transformer_forward.1} parent=5 // pred_check_branch
        %313 = sbr.rel (%p311) target = $region44
      $region43: #{transformer_forward.1} parent=5 // pred_region
        // Predicated region
        $region45: #{transformer_forward.1} parent=43 // pred_check
          %p314 = pneg %p43
        $region46: #{transformer_forward.1} parent=43 // pred_check_branch
          %316 = sbr.rel (%p314) target = $region48
        $region47: #{transformer_forward.1} parent=43 // pred_region
          %p317 = scmp.lt.s32.totalorder %s23, 1
          %s318 = scalar_select %p317, %s23, 1
          %s319 = smul.addr %s318, 8
          %s320 = smul.addr %s319, 8
          %s321 = scalar_lea.vmem %s0, %s320
        $region48: #{transformer_forward.1} parent=43 // pred_fallthru
          _
      $region44: #{transformer_forward.1} parent=5 // pred_fallthru
        _
      %p322 = scmp.le.s32.totalorder 1, %s23
      %p323 = scmp.lt.s32.totalorder %s23, 3
      %p324 = pnand %p322, %p323
      %p325 = pneg %p324
      // Predicated region
      $region49: #{transformer_forward.1} parent=5 // pred_check
        _
      $region50: #{transformer_forward.1} parent=5 // pred_check_branch
        %327 = sbr.rel (%p324) target = $region52
      $region51: #{transformer_forward.1} parent=5 // pred_region
        %s328 = ssub.s32 %s23, 1
        %p329 = scmp.lt.s32.totalorder %s28, 1
        %s330 = scalar_select %p329, %s28, 1
        %s331 = smul.addr %s330, 8
        %s332 = smul.addr %s331, 8
        %s333 = scalar_lea.vmem %s0, %s332
        %p334 = pneg %p49
        %p335 = pneg %p46
        %p336 = pneg %p70
        %p337 = pneg %p67
        %p338 = pneg %p91
        %p339 = pneg %p88
        %p340 = pneg %p112
        %p341 = pneg %p109
        %p342 = pneg %p133
        %p343 = pneg %p130
        %p344 = pneg %p154
        %p345 = pneg %p151
        %p346 = pneg %p175
        %p347 = pneg %p172
        %p348 = pneg %p196
        %p349 = pneg %p193
        %p350 = pneg %p222
        %p351 = pneg %p219
        %s352 = sand.u32 %s209, 1
        %s353 = scalar_lea.sflag [#allocation3], %s352
        %s354 = sand.u32 %s209, 1
        %s355 = scalar_lea.vmem [#allocation2], %s354
        %p356 = pneg %p248
        %p357 = pneg %p245
        %s358 = sand.u32 %s235, 1
        %s359 = scalar_lea.sflag [#allocation5], %s358
        %s360 = sand.u32 %s235, 1
        %s361 = scalar_lea.vmem [#allocation4], %s360
        %p362 = pneg %p274
        %p363 = pneg %p271
        %p364 = scmp.lt.s32.totalorder %s28, 1
        %s365 = scalar_select %p364, %s28, 1
        %s366 = scalar_lea.vmem %s10, %s365
        %p367 = scmp.lt.s32.totalorder %s28, 1
        %s368 = scalar_select %p367, %s28, 1
        %s369 = smul.addr %s368, 8
        %s370 = smul.addr %s369, 8
        %s371 = scalar_lea.vmem %s0, %s370
        %p372 = scmp.lt.s32.totalorder %s28, 1
        %s373 = scalar_select %p372, %s28, 1
        %s374 = scalar_lea.vmem %s10, %s373
        %v376 = vld [vmem:[%s371] sm:$0xff]
        %v377 = vld [vmem:[%s371 + $0x8] sm:$0xff]
        %v378 = vld [vmem:[%s371 + $0x10] sm:$0xff]
        %v379 = vld [vmem:[%s371 + $0x18] sm:$0xff]
        %v380 = vld [vmem:[%s371 + $0x20] sm:$0xff]
        %v381 = vld [vmem:[%s371 + $0x28] sm:$0xff]
        %v382 = vld [vmem:[%s371 + $0x30] sm:$0xff]
        %v383 = vld [vmem:[%s371 + $0x38] sm:$0xff]
        loop: start=0, step=1, limit=4
        $region53: #{transformer_forward.1} parent=51 // loop_pre_header
          _
        $region54: #{transformer_forward.1} parent=51 // loop_header
          %s385 = sphi 0, %s389
          %p386 = scmp.ge.s32.totalorder %s385, 4
          %v390 = vphi %v376, %v2372
          %v391 = vphi %v377, %v2373
          %v392 = vphi %v378, %v2374
          %v393 = vphi %v379, %v2375
          %v394 = vphi %v380, %v2376
          %v395 = vphi %v381, %v2377
          %v396 = vphi %v382, %v2378
          %v397 = vphi %v383, %v2379
        $region55: #{transformer_forward.1} parent=51 // loop_header_branch
          %388 = sbr.rel (%p386) target = $region59
        $region56: #{transformer_forward.1} parent=51 // loop_body
          %s398 = smul.u32 %s385, 4
          %s399 = smul.addr %s398, 4
          %s400 = scalar_lea.vmem %s1, %s399
          %v401 = vld [vmem:[%s400] sm:$0xf]
          %v402 = vld [vmem:[%s400 + $0x4] sm:$0xf]
          %v403 = vld [vmem:[%s400 + $0x8] sm:$0xf]
          %v404 = vld [vmem:[%s400 + $0xc] sm:$0xf]
          %s405 = smul.addr %s398, 4
          %s406 = scalar_lea.vmem %s2, %s405
          %v407 = vld [vmem:[%s406] sm:$0xf]
          %v408 = vld [vmem:[%s406 + $0x4] sm:$0xf]
          %v409 = vld [vmem:[%s406 + $0x8] sm:$0xf]
          %v410 = vld [vmem:[%s406 + $0xc] sm:$0xf]
          %s411 = smul.addr %s398, 4
          %s412 = scalar_lea.vmem %s3, %s411
          %v413 = vld [vmem:[%s412] sm:$0xf]
          %v414 = vld [vmem:[%s412 + $0x4] sm:$0xf]
          %v415 = vld [vmem:[%s412 + $0x8] sm:$0xf]
          %v416 = vld [vmem:[%s412 + $0xc] sm:$0xf]
          %s417 = smul.u32 %s385, 8
          %s418 = smul.addr %s417, 4
          %s419 = scalar_lea.vmem %s4, %s418
          %v420 = vld [vmem:[%s419] sm:$0xf]
          %v421 = vld [vmem:[%s419 + $0x4] sm:$0xf]
          %v422 = vld [vmem:[%s419 + $0x8] sm:$0xf]
          %v423 = vld [vmem:[%s419 + $0xc] sm:$0xf]
          %v424 = vld [vmem:[%s419 + $0x10] sm:$0xf]
          %v425 = vld [vmem:[%s419 + $0x14] sm:$0xf]
          %v426 = vld [vmem:[%s419 + $0x18] sm:$0xf]
          %v427 = vld [vmem:[%s419 + $0x1c] sm:$0xf]
          %s428 = scalar_lea.vmem %s5, %s417
          %v429 = vld [vmem:[%s428] sm:$0xff]
          %v430 = vpack.c.bf16 %v391, %v390
          %v431 = vpack.c.bf16 %v393, %v392
          %v432 = vpack.c.bf16 %v395, %v394
          %v433 = vpack.c.bf16 %v397, %v396
          %v434 = vlaneseq
          %v435 = vshrl.u32 %v434, 7
          %v436 = vsub.s32 0, %v435
          %v437 = vrot.slane %v429, %v436
          %v442 = vunpack.c.l.b16 %v401
          %v443 = vunpack.c.l.b16 %v402
          %v444 = vunpack.c.l.b16 %v403
          %v445 = vunpack.c.l.b16 %v404
          %v446 = vpack.c.b16 %v443, %v442
          %v447 = vpack.c.b16 %v445, %v444
          %vm450 = vcmask 261120
          %v452 = vsel %vm450, %v430, 0
          %v455 = vsel %vm450, %v431, 0
          %v458 = vsel %vm450, %v432, 0
          %v461 = vsel %vm450, %v433, 0
          %463 = vmatprep.subr.bf16.mxu0 0
          %464 = vmatpush1.bf16.msra.mxu0 %v446
          %465 = vmatprep.subr.bf16.mxu0 0
          %466 = vmatpush1.bf16.msra.mxu0 %v447
          %467 = vmatprep.subr.bf16.mxu0 0
          %468 = vmatpush1.bf16.msra.mxu0 0
          %469 = vmatprep.subr.bf16.mxu0 0
          %470 = vmatpush1.bf16.msra.mxu0 0
          %471 = vmatprep.subr.bf16.mxu0 0
          %472 = vmatpush1.bf16.msra.mxu0 0
          %473 = vmatprep.subr.bf16.mxu0 0
          %474 = vmatpush1.bf16.msra.mxu0 0
          %475 = vmatprep.subr.bf16.mxu0 0
          %476 = vmatpush1.bf16.msra.mxu0 0
          %477 = vmatprep.subr.bf16.mxu0 0
          %478 = vmatpush1.bf16.msra.mxu0 0
          %479 = vmatprep.subr.bf16.mxu0 0
          %480 = vmatpush1.bf16.msra.mxu0 0
          %481 = vmatprep.subr.bf16.mxu0 0
          %482 = vmatpush1.bf16.msra.mxu0 0
          %483 = vmatprep.subr.bf16.mxu0 0
          %484 = vmatpush1.bf16.msra.mxu0 0
          %485 = vmatprep.subr.bf16.mxu0 0
          %486 = vmatpush1.bf16.msra.mxu0 0
          %487 = vmatprep.subr.bf16.mxu0 0
          %488 = vmatpush1.bf16.msra.mxu0 0
          %489 = vmatprep.subr.bf16.mxu0 0
          %490 = vmatpush1.bf16.msra.mxu0 0
          %491 = vmatprep.subr.bf16.mxu0 0
          %492 = vmatpush1.bf16.msra.mxu0 0
          %493 = vmatprep.subr.bf16.mxu0 0
          %494 = vmatpush1.bf16.msra.mxu0 0
          %495 = vmatprep.mubr.bf16.mxu0 0
          %496 = vmatmul.mubr.bf16.gmra.mrb[0].mxu0 %v452
          %v497 = vpop.f32.mrb[0].mxu0
          %v498 = vadd.f32 %v437, %v497
          %v499 = vpop.f32.mrb[0].mxu0
          %v500 = vpop.f32.mrb[0].mxu0
          %v501 = vadd.f32 %v437, %v500
          %v502 = vpop.f32.mrb[0].mxu0
          %503 = vmatprep.mubr.bf16.mxu0 0
          %504 = vmatmul.mubr.bf16.gmra.mrb[0].mxu0 %v455
          %v505 = vpop.f32.mrb[0].mxu0
          %v506 = vadd.f32 %v437, %v505
          %v507 = vpop.f32.mrb[0].mxu0
          %v508 = vpop.f32.mrb[0].mxu0
          %v509 = vadd.f32 %v437, %v508
          %v510 = vpop.f32.mrb[0].mxu0
          %511 = vmatprep.mubr.bf16.mxu0 0
          %512 = vmatmul.mubr.bf16.gmra.mrb[0].mxu0 %v458
          %v513 = vpop.f32.mrb[0].mxu0
          %v514 = vadd.f32 %v437, %v513
          %v515 = vpop.f32.mrb[0].mxu0
          %v516 = vpop.f32.mrb[0].mxu0
          %v517 = vadd.f32 %v437, %v516
          %v518 = vpop.f32.mrb[0].mxu0
          %519 = vmatprep.mubr.bf16.mxu0 0
          %520 = vmatmul.mubr.bf16.gmra.mrb[0].mxu0 %v461
          %v521 = vpop.f32.mrb[0].mxu0
          %v522 = vadd.f32 %v437, %v521
          %v523 = vpop.f32.mrb[0].mxu0
          %v524 = vpop.f32.mrb[0].mxu0
          %v525 = vadd.f32 %v437, %v524
          %v526 = vpop.f32.mrb[0].mxu0
          %527 = vdwg.mxu0
          %v528 = vpack.c.bf16 %v501, %v498
          %v529 = vpack.c.bf16 %v509, %v506
          %v530 = vpack.c.bf16 %v517, %v514
          %v531 = vpack.c.bf16 %v525, %v522
          %536 = vrot.lane.b32.xlu0 %v528, 96
          %v537 = vpop.permute.xlu0 %536
          %538 = vrot.lane.b32.xlu0 %v529, 96
          %v539 = vpop.permute.xlu0 %538
          %540 = vrot.lane.b32.xlu0 %v530, 96
          %v541 = vpop.permute.xlu0 %540
          %542 = vrot.lane.b32.xlu0 %v531, 96
          %v543 = vpop.permute.xlu0 %542
          %vm544 = vcmask 64512
          %v546 = vsel %vm544, %v528, 0
          %v549 = vsel %vm544, %v529, 0
          %v552 = vsel %vm544, %v530, 0
          %v555 = vsel %vm544, %v531, 0
          %v558 = vsel %vm544, %v537, 0
          %v561 = vsel %vm544, %v539, 0
          %v564 = vsel %vm544, %v541, 0
          %v567 = vsel %vm544, %v543, 0
          %569 = vmatprep.subr.bf16.mxu0 0
          %570 = vmatpush1.bf16.xpose.msra.mxu0 %v558
          %571 = vmatprep.subr.bf16.mxu0 0
          %572 = vmatpush1.bf16.xpose.msra.mxu0 %v561
          %573 = vmatprep.subr.bf16.mxu0 0
          %574 = vmatpush1.bf16.xpose.msra.mxu0 %v564
          %575 = vmatprep.subr.bf16.mxu0 0
          %576 = vmatpush1.bf16.xpose.msra.mxu0 %v567
          %577 = vmatprep.subr.bf16.mxu0 0
          %578 = vmatpush1.bf16.xpose.msra.mxu0 0
          %579 = vmatprep.subr.bf16.mxu0 0
          %580 = vmatpush1.bf16.xpose.msra.mxu0 0
          %581 = vmatprep.subr.bf16.mxu0 0
          %582 = vmatpush1.bf16.xpose.msra.mxu0 0
          %583 = vmatprep.subr.bf16.mxu0 0
          %584 = vmatpush1.bf16.xpose.msra.mxu0 0
          %585 = vmatprep.subr.bf16.mxu0 0
          %586 = vmatpush1.bf16.xpose.msra.mxu0 0
          %587 = vmatprep.subr.bf16.mxu0 0
          %588 = vmatpush1.bf16.xpose.msra.mxu0 0
          %589 = vmatprep.subr.bf16.mxu0 0
          %590 = vmatpush1.bf16.xpose.msra.mxu0 0
          %591 = vmatprep.subr.bf16.mxu0 0
          %592 = vmatpush1.bf16.xpose.msra.mxu0 0
          %593 = vmatprep.subr.bf16.mxu0 0
          %594 = vmatpush1.bf16.xpose.msra.mxu0 0
          %595 = vmatprep.subr.bf16.mxu0 0
          %596 = vmatpush1.bf16.xpose.msra.mxu0 0
          %597 = vmatprep.subr.bf16.mxu0 0
          %598 = vmatpush1.bf16.xpose.msra.mxu0 0
          %599 = vmatprep.subr.bf16.mxu0 0
          %600 = vmatpush1.bf16.xpose.msra.mxu0 0
          %601 = vmatprep.mubr.bf16.mxu0 0
          %602 = vmatmul.mubr.bf16.gmra.mrb[0].mxu0 %v546
          %v603 = vpop.f32.mrb[0].mxu0
          %v604 = vadd.f32 0.0, %v603
          %v605 = vpop.f32.mrb[0].mxu0
          %v606 = vpop.f32.mrb[0].mxu0
          %v607 = vadd.f32 0.0, %v606
          %v608 = vpop.f32.mrb[0].mxu0
          %609 = vmatprep.mubr.bf16.mxu0 0
          %610 = vmatmul.mubr.bf16.gmra.mrb[0].mxu0 %v549
          %v611 = vpop.f32.mrb[0].mxu0
          %v612 = vadd.f32 0.0, %v611
          %v613 = vpop.f32.mrb[0].mxu0
          %v614 = vpop.f32.mrb[0].mxu0
          %v615 = vadd.f32 0.0, %v614
          %v616 = vpop.f32.mrb[0].mxu0
          %617 = vmatprep.mubr.bf16.mxu0 0
          %618 = vmatmul.mubr.bf16.gmra.mrb[0].mxu0 %v552
          %v619 = vpop.f32.mrb[0].mxu0
          %v620 = vadd.f32 0.0, %v619
          %v621 = vpop.f32.mrb[0].mxu0
          %v622 = vpop.f32.mrb[0].mxu0
          %v623 = vadd.f32 0.0, %v622
          %v624 = vpop.f32.mrb[0].mxu0
          %625 = vmatprep.mubr.bf16.mxu0 0
          %626 = vmatmul.mubr.bf16.gmra.mrb[0].mxu0 %v555
          %v627 = vpop.f32.mrb[0].mxu0
          %v628 = vadd.f32 0.0, %v627
          %v629 = vpop.f32.mrb[0].mxu0
          %v630 = vpop.f32.mrb[0].mxu0
          %v631 = vadd.f32 0.0, %v630
          %v632 = vpop.f32.mrb[0].mxu0
          %633 = vdwg.mxu0
          %vm634 = vcmask 523264
          %v635 = vsel %vm634, %v604, -inf
          %636 = vmax.xlane.f32.xlu0 %v635
          %v637 = vpop.xlane.xlu0 %636
          %v638 = vsel %vm634, %v607, -inf
          %639 = vmax.xlane.f32.xlu0 %v638
          %v640 = vpop.xlane.xlu0 %639
          %v641 = vsel %vm634, %v612, -inf
          %642 = vmax.xlane.f32.xlu0 %v641
          %v643 = vpop.xlane.xlu0 %642
          %v644 = vsel %vm634, %v615, -inf
          %645 = vmax.xlane.f32.xlu0 %v644
          %v646 = vpop.xlane.xlu0 %645
          %v647 = vsel %vm634, %v620, -inf
          %648 = vmax.xlane.f32.xlu0 %v647
          %v649 = vpop.xlane.xlu0 %648
          %v650 = vsel %vm634, %v623, -inf
          %651 = vmax.xlane.f32.xlu0 %v650
          %v652 = vpop.xlane.xlu0 %651
          %v653 = vsel %vm634, %v628, -inf
          %654 = vmax.xlane.f32.xlu0 %v653
          %v655 = vpop.xlane.xlu0 %654
          %v656 = vsel %vm634, %v631, -inf
          %657 = vmax.xlane.f32.xlu0 %v656
          %v658 = vpop.xlane.xlu0 %657
          %v659 = vsub.f32 %v604, %v637
          %v660 = vsub.f32 %v607, %v640
          %v661 = vsub.f32 %v612, %v643
          %v662 = vsub.f32 %v615, %v646
          %v663 = vsub.f32 %v620, %v649
          %v664 = vsub.f32 %v623, %v652
          %v665 = vsub.f32 %v628, %v655
          %v666 = vsub.f32 %v631, %v658
          %v667 = vmul.f32 %v659, 1.442695
          %v668 = vpow.pop %v667
          %v669 = vmul.f32 %v660, 1.442695
          %v670 = vpow.pop %v669
          %v671 = vmul.f32 %v661, 1.442695
          %v672 = vpow.pop %v671
          %v673 = vmul.f32 %v662, 1.442695
          %v674 = vpow.pop %v673
          %v675 = vmul.f32 %v663, 1.442695
          %v676 = vpow.pop %v675
          %v677 = vmul.f32 %v664, 1.442695
          %v678 = vpow.pop %v677
          %v679 = vmul.f32 %v665, 1.442695
          %v680 = vpow.pop %v679
          %v681 = vmul.f32 %v666, 1.442695
          %v682 = vpow.pop %v681
          %v683 = vsel %vm634, %v668, 0.0
          %684 = vadd.xlane.f32.xlu0 %v683
          %v685 = vpop.xlane.xlu0 %684
          %v686 = vsel %vm634, %v670, 0.0
          %687 = vadd.xlane.f32.xlu0 %v686
          %v688 = vpop.xlane.xlu0 %687
          %v689 = vsel %vm634, %v672, 0.0
          %690 = vadd.xlane.f32.xlu0 %v689
          %v691 = vpop.xlane.xlu0 %690
          %v692 = vsel %vm634, %v674, 0.0
          %693 = vadd.xlane.f32.xlu0 %v692
          %v694 = vpop.xlane.xlu0 %693
          %v695 = vsel %vm634, %v676, 0.0
          %696 = vadd.xlane.f32.xlu0 %v695
          %v697 = vpop.xlane.xlu0 %696
          %v698 = vsel %vm634, %v678, 0.0
          %699 = vadd.xlane.f32.xlu0 %v698
          %v700 = vpop.xlane.xlu0 %699
          %v701 = vsel %vm634, %v680, 0.0
          %702 = vadd.xlane.f32.xlu0 %v701
          %v703 = vpop.xlane.xlu0 %702
          %v704 = vsel %vm634, %v682, 0.0
          %705 = vadd.xlane.f32.xlu0 %v704
          %v706 = vpop.xlane.xlu0 %705
          %v707 = vrcp.pop %v685
          %v708 = vrcp.pop %v688
          %v709 = vrcp.pop %v691
          %v710 = vrcp.pop %v694
          %v711 = vrcp.pop %v697
          %v712 = vrcp.pop %v700
          %v713 = vrcp.pop %v703
          %v714 = vrcp.pop %v706
          %v715 = vmul.f32 %v668, %v707
          %v716 = vmul.f32 %v670, %v708
          %v717 = vmul.f32 %v672, %v709
          %v718 = vmul.f32 %v674, %v710
          %v719 = vmul.f32 %v676, %v711
          %v720 = vmul.f32 %v678, %v712
          %v721 = vmul.f32 %v680, %v713
          %v722 = vmul.f32 %v682, %v714
          %v723 = vpack.c.bf16 %v716, %v715
          %v724 = vpack.c.bf16 %v718, %v717
          %v725 = vpack.c.bf16 %v720, %v719
          %v726 = vpack.c.bf16 %v722, %v721
          %727 = vrot.lane.b32.xlu0 %v528, 64
          %v728 = vpop.permute.xlu0 %727
          %729 = vrot.lane.b32.xlu0 %v529, 64
          %v730 = vpop.permute.xlu0 %729
          %731 = vrot.lane.b32.xlu0 %v530, 64
          %v732 = vpop.permute.xlu0 %731
          %733 = vrot.lane.b32.xlu0 %v531, 64
          %v734 = vpop.permute.xlu0 %733
          %v740 = vsel %vm634, %v723, 0
          %v743 = vsel %vm634, %v724, 0
          %v746 = vsel %vm634, %v725, 0
          %v749 = vsel %vm634, %v726, 0
          %751 = vmatprep.subr.bf16.mxu0 0
          %752 = vmatpush1.bf16.msra.mxu0 %v728
          %753 = vmatprep.subr.bf16.mxu0 0
          %754 = vmatpush1.bf16.msra.mxu0 %v730
          %755 = vmatprep.subr.bf16.mxu0 0
          %756 = vmatpush1.bf16.msra.mxu0 %v732
          %757 = vmatprep.subr.bf16.mxu0 0
          %758 = vmatpush1.bf16.msra.mxu0 %v734
          %759 = vmatprep.subr.bf16.mxu0 0
          %760 = vmatpush1.bf16.msra.mxu0 0
          %761 = vmatprep.subr.bf16.mxu0 0
          %762 = vmatpush1.bf16.msra.mxu0 0
          %763 = vmatprep.subr.bf16.mxu0 0
          %764 = vmatpush1.bf16.msra.mxu0 0
          %765 = vmatprep.subr.bf16.mxu0 0
          %766 = vmatpush1.bf16.msra.mxu0 0
          %767 = vmatprep.subr.bf16.mxu0 0
          %768 = vmatpush1.bf16.msra.mxu0 0
          %769 = vmatprep.subr.bf16.mxu0 0
          %770 = vmatpush1.bf16.msra.mxu0 0
          %771 = vmatprep.subr.bf16.mxu0 0
          %772 = vmatpush1.bf16.msra.mxu0 0
          %773 = vmatprep.subr.bf16.mxu0 0
          %774 = vmatpush1.bf16.msra.mxu0 0
          %775 = vmatprep.subr.bf16.mxu0 0
          %776 = vmatpush1.bf16.msra.mxu0 0
          %777 = vmatprep.subr.bf16.mxu0 0
          %778 = vmatpush1.bf16.msra.mxu0 0
          %779 = vmatprep.subr.bf16.mxu0 0
          %780 = vmatpush1.bf16.msra.mxu0 0
          %781 = vmatprep.subr.bf16.mxu0 0
          %782 = vmatpush1.bf16.msra.mxu0 0
          %783 = vmatprep.mubr.bf16.mxu0 0
          %784 = vmatmul.mubr.bf16.gmra.mrb[0].mxu0 %v740
          %v785 = vpop.f32.mrb[0].mxu0
          %v786 = vadd.f32 0.0, %v785
          %v787 = vpop.f32.mrb[0].mxu0
          %v788 = vpop.f32.mrb[0].mxu0
          %v789 = vadd.f32 0.0, %v788
          %v790 = vpop.f32.mrb[0].mxu0
          %791 = vmatprep.mubr.bf16.mxu0 0
          %792 = vmatmul.mubr.bf16.gmra.mrb[0].mxu0 %v743
          %v793 = vpop.f32.mrb[0].mxu0
          %v794 = vadd.f32 0.0, %v793
          %v795 = vpop.f32.mrb[0].mxu0
          %v796 = vpop.f32.mrb[0].mxu0
          %v797 = vadd.f32 0.0, %v796
          %v798 = vpop.f32.mrb[0].mxu0
          %799 = vmatprep.mubr.bf16.mxu0 0
          %800 = vmatmul.mubr.bf16.gmra.mrb[0].mxu0 %v746
          %v801 = vpop.f32.mrb[0].mxu0
          %v802 = vadd.f32 0.0, %v801
          %v803 = vpop.f32.mrb[0].mxu0
          %v804 = vpop.f32.mrb[0].mxu0
          %v805 = vadd.f32 0.0, %v804
          %v806 = vpop.f32.mrb[0].mxu0
          %807 = vmatprep.mubr.bf16.mxu0 0
          %808 = vmatmul.mubr.bf16.gmra.mrb[0].mxu0 %v749
          %v809 = vpop.f32.mrb[0].mxu0
          %v810 = vadd.f32 0.0, %v809
          %v811 = vpop.f32.mrb[0].mxu0
          %v812 = vpop.f32.mrb[0].mxu0
          %v813 = vadd.f32 0.0, %v812
          %v814 = vpop.f32.mrb[0].mxu0
          %815 = vdwg.mxu0
          %816 = vrot.lane.b32.xlu0 %v528, 120
          %v817 = vpop.permute.xlu0 %816
          %818 = vrot.lane.b32.xlu0 %v529, 120
          %v819 = vpop.permute.xlu0 %818
          %820 = vrot.lane.b32.xlu0 %v530, 120
          %v821 = vpop.permute.xlu0 %820
          %822 = vrot.lane.b32.xlu0 %v531, 120
          %v823 = vpop.permute.xlu0 %822
          %824 = vrot.lane.b32.xlu0 %v528, 88
          %v825 = vpop.permute.xlu0 %824
          %826 = vrot.lane.b32.xlu0 %v529, 88
          %v827 = vpop.permute.xlu0 %826
          %828 = vrot.lane.b32.xlu0 %v530, 88
          %v829 = vpop.permute.xlu0 %828
          %830 = vrot.lane.b32.xlu0 %v531, 88
          %v831 = vpop.permute.xlu0 %830
          %v833 = vsel %vm544, %v817, 0
          %v836 = vsel %vm544, %v819, 0
          %v839 = vsel %vm544, %v821, 0
          %v842 = vsel %vm544, %v823, 0
          %v845 = vsel %vm544, %v825, 0
          %v848 = vsel %vm544, %v827, 0
          %v851 = vsel %vm544, %v829, 0
          %v854 = vsel %vm544, %v831, 0
          %856 = vmatprep.subr.bf16.mxu0 0
          %857 = vmatpush1.bf16.xpose.msra.mxu0 %v845
          %858 = vmatprep.subr.bf16.mxu0 0
          %859 = vmatpush1.bf16.xpose.msra.mxu0 %v848
          %860 = vmatprep.subr.bf16.mxu0 0
          %861 = vmatpush1.bf16.xpose.msra.mxu0 %v851
          %862 = vmatprep.subr.bf16.mxu0 0
          %863 = vmatpush1.bf16.xpose.msra.mxu0 %v854
          %864 = vmatprep.subr.bf16.mxu0 0
          %865 = vmatpush1.bf16.xpose.msra.mxu0 0
          %866 = vmatprep.subr.bf16.mxu0 0
          %867 = vmatpush1.bf16.xpose.msra.mxu0 0
          %868 = vmatprep.subr.bf16.mxu0 0
          %869 = vmatpush1.bf16.xpose.msra.mxu0 0
          %870 = vmatprep.subr.bf16.mxu0 0
          %871 = vmatpush1.bf16.xpose.msra.mxu0 0
          %872 = vmatprep.subr.bf16.mxu0 0
          %873 = vmatpush1.bf16.xpose.msra.mxu0 0
          %874 = vmatprep.subr.bf16.mxu0 0
          %875 = vmatpush1.bf16.xpose.msra.mxu0 0
          %876 = vmatprep.subr.bf16.mxu0 0
          %877 = vmatpush1.bf16.xpose.msra.mxu0 0
          %878 = vmatprep.subr.bf16.mxu0 0
          %879 = vmatpush1.bf16.xpose.msra.mxu0 0
          %880 = vmatprep.subr.bf16.mxu0 0
          %881 = vmatpush1.bf16.xpose.msra.mxu0 0
          %882 = vmatprep.subr.bf16.mxu0 0
          %883 = vmatpush1.bf16.xpose.msra.mxu0 0
          %884 = vmatprep.subr.bf16.mxu0 0
          %885 = vmatpush1.bf16.xpose.msra.mxu0 0
          %886 = vmatprep.subr.bf16.mxu0 0
          %887 = vmatpush1.bf16.xpose.msra.mxu0 0
          %888 = vmatprep.mubr.bf16.mxu0 0
          %889 = vmatmul.mubr.bf16.gmra.mrb[0].mxu0 %v833
          %v890 = vpop.f32.mrb[0].mxu0
          %v891 = vadd.f32 0.0, %v890
          %v892 = vpop.f32.mrb[0].mxu0
          %v893 = vpop.f32.mrb[0].mxu0
          %v894 = vadd.f32 0.0, %v893
          %v895 = vpop.f32.mrb[0].mxu0
          %896 = vmatprep.mubr.bf16.mxu0 0
          %897 = vmatmul.mubr.bf16.gmra.mrb[0].mxu0 %v836
          %v898 = vpop.f32.mrb[0].mxu0
          %v899 = vadd.f32 0.0, %v898
          %v900 = vpop.f32.mrb[0].mxu0
          %v901 = vpop.f32.mrb[0].mxu0
          %v902 = vadd.f32 0.0, %v901
          %v903 = vpop.f32.mrb[0].mxu0
          %904 = vmatprep.mubr.bf16.mxu0 0
          %905 = vmatmul.mubr.bf16.gmra.mrb[0].mxu0 %v839
          %v906 = vpop.f32.mrb[0].mxu0
          %v907 = vadd.f32 0.0, %v906
          %v908 = vpop.f32.mrb[0].mxu0
          %v909 = vpop.f32.mrb[0].mxu0
          %v910 = vadd.f32 0.0, %v909
          %v911 = vpop.f32.mrb[0].mxu0
          %912 = vmatprep.mubr.bf16.mxu0 0
          %913 = vmatmul.mubr.bf16.gmra.mrb[0].mxu0 %v842
          %v914 = vpop.f32.mrb[0].mxu0
          %v915 = vadd.f32 0.0, %v914
          %v916 = vpop.f32.mrb[0].mxu0
          %v917 = vpop.f32.mrb[0].mxu0
          %v918 = vadd.f32 0.0, %v917
          %v919 = vpop.f32.mrb[0].mxu0
          %920 = vdwg.mxu0
          %v921 = vsel %vm634, %v891, -inf
          %922 = vmax.xlane.f32.xlu0 %v921
          %v923 = vpop.xlane.xlu0 %922
          %v924 = vsel %vm634, %v894, -inf
          %925 = vmax.xlane.f32.xlu0 %v924
          %v926 = vpop.xlane.xlu0 %925
          %v927 = vsel %vm634, %v899, -inf
          %928 = vmax.xlane.f32.xlu0 %v927
          %v929 = vpop.xlane.xlu0 %928
          %v930 = vsel %vm634, %v902, -inf
          %931 = vmax.xlane.f32.xlu0 %v930
          %v932 = vpop.xlane.xlu0 %931
          %v933 = vsel %vm634, %v907, -inf
          %934 = vmax.xlane.f32.xlu0 %v933
          %v935 = vpop.xlane.xlu0 %934
          %v936 = vsel %vm634, %v910, -inf
          %937 = vmax.xlane.f32.xlu0 %v936
          %v938 = vpop.xlane.xlu0 %937
          %v939 = vsel %vm634, %v915, -inf
          %940 = vmax.xlane.f32.xlu0 %v939
          %v941 = vpop.xlane.xlu0 %940
          %v942 = vsel %vm634, %v918, -inf
          %943 = vmax.xlane.f32.xlu0 %v942
          %v944 = vpop.xlane.xlu0 %943
          %v945 = vsub.f32 %v891, %v923
          %v946 = vsub.f32 %v894, %v926
          %v947 = vsub.f32 %v899, %v929
          %v948 = vsub.f32 %v902, %v932
          %v949 = vsub.f32 %v907, %v935
          %v950 = vsub.f32 %v910, %v938
          %v951 = vsub.f32 %v915, %v941
          %v952 = vsub.f32 %v918, %v944
          %v953 = vmul.f32 %v945, 1.442695
          %v954 = vpow.pop %v953
          %v955 = vmul.f32 %v946, 1.442695
          %v956 = vpow.pop %v955
          %v957 = vmul.f32 %v947, 1.442695
          %v958 = vpow.pop %v957
          %v959 = vmul.f32 %v948, 1.442695
          %v960 = vpow.pop %v959
          %v961 = vmul.f32 %v949, 1.442695
          %v962 = vpow.pop %v961
          %v963 = vmul.f32 %v950, 1.442695
          %v964 = vpow.pop %v963
          %v965 = vmul.f32 %v951, 1.442695
          %v966 = vpow.pop %v965
          %v967 = vmul.f32 %v952, 1.442695
          %v968 = vpow.pop %v967
          %v969 = vsel %vm634, %v954, 0.0
          %970 = vadd.xlane.f32.xlu0 %v969
          %v971 = vpop.xlane.xlu0 %970
          %v972 = vsel %vm634, %v956, 0.0
          %973 = vadd.xlane.f32.xlu0 %v972
          %v974 = vpop.xlane.xlu0 %973
          %v975 = vsel %vm634, %v958, 0.0
          %976 = vadd.xlane.f32.xlu0 %v975
          %v977 = vpop.xlane.xlu0 %976
          %v978 = vsel %vm634, %v960, 0.0
          %979 = vadd.xlane.f32.xlu0 %v978
          %v980 = vpop.xlane.xlu0 %979
          %v981 = vsel %vm634, %v962, 0.0
          %982 = vadd.xlane.f32.xlu0 %v981
          %v983 = vpop.xlane.xlu0 %982
          %v984 = vsel %vm634, %v964, 0.0
          %985 = vadd.xlane.f32.xlu0 %v984
          %v986 = vpop.xlane.xlu0 %985
          %v987 = vsel %vm634, %v966, 0.0
          %988 = vadd.xlane.f32.xlu0 %v987
          %v989 = vpop.xlane.xlu0 %988
          %v990 = vsel %vm634, %v968, 0.0
          %991 = vadd.xlane.f32.xlu0 %v990
          %v992 = vpop.xlane.xlu0 %991
          %v993 = vrcp.pop %v971
          %v994 = vrcp.pop %v974
          %v995 = vrcp.pop %v977
          %v996 = vrcp.pop %v980
          %v997 = vrcp.pop %v983
          %v998 = vrcp.pop %v986
          %v999 = vrcp.pop %v989
          %v1000 = vrcp.pop %v992
          %v1001 = vmul.f32 %v954, %v993
          %v1002 = vmul.f32 %v956, %v994
          %v1003 = vmul.f32 %v958, %v995
          %v1004 = vmul.f32 %v960, %v996
          %v1005 = vmul.f32 %v962, %v997
          %v1006 = vmul.f32 %v964, %v998
          %v1007 = vmul.f32 %v966, %v999
          %v1008 = vmul.f32 %v968, %v1000
          %v1009 = vpack.c.bf16 %v1002, %v1001
          %v1010 = vpack.c.bf16 %v1004, %v1003
          %v1011 = vpack.c.bf16 %v1006, %v1005
          %v1012 = vpack.c.bf16 %v1008, %v1007
          %1013 = vrot.lane.b32.xlu0 %v528, 56
          %v1014 = vpop.permute.xlu0 %1013
          %1015 = vrot.lane.b32.xlu0 %v529, 56
          %v1016 = vpop.permute.xlu0 %1015
          %1017 = vrot.lane.b32.xlu0 %v530, 56
          %v1018 = vpop.permute.xlu0 %1017
          %1019 = vrot.lane.b32.xlu0 %v531, 56
          %v1020 = vpop.permute.xlu0 %1019
          %v1026 = vsel %vm634, %v1009, 0
          %v1029 = vsel %vm634, %v1010, 0
          %v1032 = vsel %vm634, %v1011, 0
          %v1035 = vsel %vm634, %v1012, 0
          %1037 = vmatprep.subr.bf16.mxu0 0
          %1038 = vmatpush1.bf16.msra.mxu0 %v1014
          %1039 = vmatprep.subr.bf16.mxu0 0
          %1040 = vmatpush1.bf16.msra.mxu0 %v1016
          %1041 = vmatprep.subr.bf16.mxu0 0
          %1042 = vmatpush1.bf16.msra.mxu0 %v1018
          %1043 = vmatprep.subr.bf16.mxu0 0
          %1044 = vmatpush1.bf16.msra.mxu0 %v1020
          %1045 = vmatprep.subr.bf16.mxu0 0
          %1046 = vmatpush1.bf16.msra.mxu0 0
          %1047 = vmatprep.subr.bf16.mxu0 0
          %1048 = vmatpush1.bf16.msra.mxu0 0
          %1049 = vmatprep.subr.bf16.mxu0 0
          %1050 = vmatpush1.bf16.msra.mxu0 0
          %1051 = vmatprep.subr.bf16.mxu0 0
          %1052 = vmatpush1.bf16.msra.mxu0 0
          %1053 = vmatprep.subr.bf16.mxu0 0
          %1054 = vmatpush1.bf16.msra.mxu0 0
          %1055 = vmatprep.subr.bf16.mxu0 0
          %1056 = vmatpush1.bf16.msra.mxu0 0
          %1057 = vmatprep.subr.bf16.mxu0 0
          %1058 = vmatpush1.bf16.msra.mxu0 0
          %1059 = vmatprep.subr.bf16.mxu0 0
          %1060 = vmatpush1.bf16.msra.mxu0 0
          %1061 = vmatprep.subr.bf16.mxu0 0
          %1062 = vmatpush1.bf16.msra.mxu0 0
          %1063 = vmatprep.subr.bf16.mxu0 0
          %1064 = vmatpush1.bf16.msra.mxu0 0
          %1065 = vmatprep.subr.bf16.mxu0 0
          %1066 = vmatpush1.bf16.msra.mxu0 0
          %1067 = vmatprep.subr.bf16.mxu0 0
          %1068 = vmatpush1.bf16.msra.mxu0 0
          %1069 = vmatprep.mubr.bf16.mxu0 0
          %1070 = vmatmul.mubr.bf16.gmra.mrb[0].mxu0 %v1026
          %v1071 = vpop.f32.mrb[0].mxu0
          %v1072 = vadd.f32 0.0, %v1071
          %v1073 = vpop.f32.mrb[0].mxu0
          %v1074 = vpop.f32.mrb[0].mxu0
          %v1075 = vadd.f32 0.0, %v1074
          %v1076 = vpop.f32.mrb[0].mxu0
          %1077 = vmatprep.mubr.bf16.mxu0 0
          %1078 = vmatmul.mubr.bf16.gmra.mrb[0].mxu0 %v1029
          %v1079 = vpop.f32.mrb[0].mxu0
          %v1080 = vadd.f32 0.0, %v1079
          %v1081 = vpop.f32.mrb[0].mxu0
          %v1082 = vpop.f32.mrb[0].mxu0
          %v1083 = vadd.f32 0.0, %v1082
          %v1084 = vpop.f32.mrb[0].mxu0
          %1085 = vmatprep.mubr.bf16.mxu0 0
          %1086 = vmatmul.mubr.bf16.gmra.mrb[0].mxu0 %v1032
          %v1087 = vpop.f32.mrb[0].mxu0
          %v1088 = vadd.f32 0.0, %v1087
          %v1089 = vpop.f32.mrb[0].mxu0
          %v1090 = vpop.f32.mrb[0].mxu0
          %v1091 = vadd.f32 0.0, %v1090
          %v1092 = vpop.f32.mrb[0].mxu0
          %1093 = vmatprep.mubr.bf16.mxu0 0
          %1094 = vmatmul.mubr.bf16.gmra.mrb[0].mxu0 %v1035
          %v1095 = vpop.f32.mrb[0].mxu0
          %v1096 = vadd.f32 0.0, %v1095
          %v1097 = vpop.f32.mrb[0].mxu0
          %v1098 = vpop.f32.mrb[0].mxu0
          %v1099 = vadd.f32 0.0, %v1098
          %v1100 = vpop.f32.mrb[0].mxu0
          %1101 = vdwg.mxu0
          %1102 = vrot.lane.b32.xlu0 %v528, 112
          %v1103 = vpop.permute.xlu0 %1102
          %1104 = vrot.lane.b32.xlu0 %v529, 112
          %v1105 = vpop.permute.xlu0 %1104
          %1106 = vrot.lane.b32.xlu0 %v530, 112
          %v1107 = vpop.permute.xlu0 %1106
          %1108 = vrot.lane.b32.xlu0 %v531, 112
          %v1109 = vpop.permute.xlu0 %1108
          %1110 = vrot.lane.b32.xlu0 %v528, 80
          %v1111 = vpop.permute.xlu0 %1110
          %1112 = vrot.lane.b32.xlu0 %v529, 80
          %v1113 = vpop.permute.xlu0 %1112
          %1114 = vrot.lane.b32.xlu0 %v530, 80
          %v1115 = vpop.permute.xlu0 %1114
          %1116 = vrot.lane.b32.xlu0 %v531, 80
          %v1117 = vpop.permute.xlu0 %1116
          %v1119 = vsel %vm544, %v1103, 0
          %v1122 = vsel %vm544, %v1105, 0
          %v1125 = vsel %vm544, %v1107, 0
          %v1128 = vsel %vm544, %v1109, 0
          %v1131 = vsel %vm544, %v1111, 0
          %v1134 = vsel %vm544, %v1113, 0
          %v1137 = vsel %vm544, %v1115, 0
          %v1140 = vsel %vm544, %v1117, 0
          %1142 = vmatprep.subr.bf16.mxu0 0
          %1143 = vmatpush1.bf16.xpose.msra.mxu0 %v1131
          %1144 = vmatprep.subr.bf16.mxu0 0
          %1145 = vmatpush1.bf16.xpose.msra.mxu0 %v1134
          %1146 = vmatprep.subr.bf16.mxu0 0
          %1147 = vmatpush1.bf16.xpose.msra.mxu0 %v1137
          %1148 = vmatprep.subr.bf16.mxu0 0
          %1149 = vmatpush1.bf16.xpose.msra.mxu0 %v1140
          %1150 = vmatprep.subr.bf16.mxu0 0
          %1151 = vmatpush1.bf16.xpose.msra.mxu0 0
          %1152 = vmatprep.subr.bf16.mxu0 0
          %1153 = vmatpush1.bf16.xpose.msra.mxu0 0
          %1154 = vmatprep.subr.bf16.mxu0 0
          %1155 = vmatpush1.bf16.xpose.msra.mxu0 0
          %1156 = vmatprep.subr.bf16.mxu0 0
          %1157 = vmatpush1.bf16.xpose.msra.mxu0 0
          %1158 = vmatprep.subr.bf16.mxu0 0
          %1159 = vmatpush1.bf16.xpose.msra.mxu0 0
          %1160 = vmatprep.subr.bf16.mxu0 0
          %1161 = vmatpush1.bf16.xpose.msra.mxu0 0
          %1162 = vmatprep.subr.bf16.mxu0 0
          %1163 = vmatpush1.bf16.xpose.msra.mxu0 0
          %1164 = vmatprep.subr.bf16.mxu0 0
          %1165 = vmatpush1.bf16.xpose.msra.mxu0 0
          %1166 = vmatprep.subr.bf16.mxu0 0
          %1167 = vmatpush1.bf16.xpose.msra.mxu0 0
          %1168 = vmatprep.subr.bf16.mxu0 0
          %1169 = vmatpush1.bf16.xpose.msra.mxu0 0
          %1170 = vmatprep.subr.bf16.mxu0 0
          %1171 = vmatpush1.bf16.xpose.msra.mxu0 0
          %1172 = vmatprep.subr.bf16.mxu0 0
          %1173 = vmatpush1.bf16.xpose.msra.mxu0 0
          %1174 = vmatprep.mubr.bf16.mxu0 0
          %1175 = vmatmul.mubr.bf16.gmra.mrb[0].mxu0 %v1119
          %v1176 = vpop.f32.mrb[0].mxu0
          %v1177 = vadd.f32 0.0, %v1176
          %v1178 = vpop.f32.mrb[0].mxu0
          %v1179 = vpop.f32.mrb[0].mxu0
          %v1180 = vadd.f32 0.0, %v1179
          %v1181 = vpop.f32.mrb[0].mxu0
          %1182 = vmatprep.mubr.bf16.mxu0 0
          %1183 = vmatmul.mubr.bf16.gmra.mrb[0].mxu0 %v1122
          %v1184 = vpop.f32.mrb[0].mxu0
          %v1185 = vadd.f32 0.0, %v1184
          %v1186 = vpop.f32.mrb[0].mxu0
          %v1187 = vpop.f32.mrb[0].mxu0
          %v1188 = vadd.f32 0.0, %v1187
          %v1189 = vpop.f32.mrb[0].mxu0
          %1190 = vmatprep.mubr.bf16.mxu0 0
          %1191 = vmatmul.mubr.bf16.gmra.mrb[0].mxu0 %v1125
          %v1192 = vpop.f32.mrb[0].mxu0
          %v1193 = vadd.f32 0.0, %v1192
          %v1194 = vpop.f32.mrb[0].mxu0
          %v1195 = vpop.f32.mrb[0].mxu0
          %v1196 = vadd.f32 0.0, %v1195
          %v1197 = vpop.f32.mrb[0].mxu0
          %1198 = vmatprep.mubr.bf16.mxu0 0
          %1199 = vmatmul.mubr.bf16.gmra.mrb[0].mxu0 %v1128
          %v1200 = vpop.f32.mrb[0].mxu0
          %v1201 = vadd.f32 0.0, %v1200
          %v1202 = vpop.f32.mrb[0].mxu0
          %v1203 = vpop.f32.mrb[0].mxu0
          %v1204 = vadd.f32 0.0, %v1203
          %v1205 = vpop.f32.mrb[0].mxu0
          %1206 = vdwg.mxu0
          %v1207 = vsel %vm634, %v1177, -inf
          %1208 = vmax.xlane.f32.xlu0 %v1207
          %v1209 = vpop.xlane.xlu0 %1208
          %v1210 = vsel %vm634, %v1180, -inf
          %1211 = vmax.xlane.f32.xlu0 %v1210
          %v1212 = vpop.xlane.xlu0 %1211
          %v1213 = vsel %vm634, %v1185, -inf
          %1214 = vmax.xlane.f32.xlu0 %v1213
          %v1215 = vpop.xlane.xlu0 %1214
          %v1216 = vsel %vm634, %v1188, -inf
          %1217 = vmax.xlane.f32.xlu0 %v1216
          %v1218 = vpop.xlane.xlu0 %1217
          %v1219 = vsel %vm634, %v1193, -inf
          %1220 = vmax.xlane.f32.xlu0 %v1219
          %v1221 = vpop.xlane.xlu0 %1220
          %v1222 = vsel %vm634, %v1196, -inf
          %1223 = vmax.xlane.f32.xlu0 %v1222
          %v1224 = vpop.xlane.xlu0 %1223
          %v1225 = vsel %vm634, %v1201, -inf
          %1226 = vmax.xlane.f32.xlu0 %v1225
          %v1227 = vpop.xlane.xlu0 %1226
          %v1228 = vsel %vm634, %v1204, -inf
          %1229 = vmax.xlane.f32.xlu0 %v1228
          %v1230 = vpop.xlane.xlu0 %1229
          %v1231 = vsub.f32 %v1177, %v1209
          %v1232 = vsub.f32 %v1180, %v1212
          %v1233 = vsub.f32 %v1185, %v1215
          %v1234 = vsub.f32 %v1188, %v1218
          %v1235 = vsub.f32 %v1193, %v1221
          %v1236 = vsub.f32 %v1196, %v1224
          %v1237 = vsub.f32 %v1201, %v1227
          %v1238 = vsub.f32 %v1204, %v1230
          %v1239 = vmul.f32 %v1231, 1.442695
          %v1240 = vpow.pop %v1239
          %v1241 = vmul.f32 %v1232, 1.442695
          %v1242 = vpow.pop %v1241
          %v1243 = vmul.f32 %v1233, 1.442695
          %v1244 = vpow.pop %v1243
          %v1245 = vmul.f32 %v1234, 1.442695
          %v1246 = vpow.pop %v1245
          %v1247 = vmul.f32 %v1235, 1.442695
          %v1248 = vpow.pop %v1247
          %v1249 = vmul.f32 %v1236, 1.442695
          %v1250 = vpow.pop %v1249
          %v1251 = vmul.f32 %v1237, 1.442695
          %v1252 = vpow.pop %v1251
          %v1253 = vmul.f32 %v1238, 1.442695
          %v1254 = vpow.pop %v1253
          %v1255 = vsel %vm634, %v1240, 0.0
          %1256 = vadd.xlane.f32.xlu0 %v1255
          %v1257 = vpop.xlane.xlu0 %1256
          %v1258 = vsel %vm634, %v1242, 0.0
          %1259 = vadd.xlane.f32.xlu0 %v1258
          %v1260 = vpop.xlane.xlu0 %1259
          %v1261 = vsel %vm634, %v1244, 0.0
          %1262 = vadd.xlane.f32.xlu0 %v1261
          %v1263 = vpop.xlane.xlu0 %1262
          %v1264 = vsel %vm634, %v1246, 0.0
          %1265 = vadd.xlane.f32.xlu0 %v1264
          %v1266 = vpop.xlane.xlu0 %1265
          %v1267 = vsel %vm634, %v1248, 0.0
          %1268 = vadd.xlane.f32.xlu0 %v1267
          %v1269 = vpop.xlane.xlu0 %1268
          %v1270 = vsel %vm634, %v1250, 0.0
          %1271 = vadd.xlane.f32.xlu0 %v1270
          %v1272 = vpop.xlane.xlu0 %1271
          %v1273 = vsel %vm634, %v1252, 0.0
          %1274 = vadd.xlane.f32.xlu0 %v1273
          %v1275 = vpop.xlane.xlu0 %1274
          %v1276 = vsel %vm634, %v1254, 0.0
          %1277 = vadd.xlane.f32.xlu0 %v1276
          %v1278 = vpop.xlane.xlu0 %1277
          %v1279 = vrcp.pop %v1257
          %v1280 = vrcp.pop %v1260
          %v1281 = vrcp.pop %v1263
          %v1282 = vrcp.pop %v1266
          %v1283 = vrcp.pop %v1269
          %v1284 = vrcp.pop %v1272
          %v1285 = vrcp.pop %v1275
          %v1286 = vrcp.pop %v1278
          %v1287 = vmul.f32 %v1240, %v1279
          %v1288 = vmul.f32 %v1242, %v1280
          %v1289 = vmul.f32 %v1244, %v1281
          %v1290 = vmul.f32 %v1246, %v1282
          %v1291 = vmul.f32 %v1248, %v1283
          %v1292 = vmul.f32 %v1250, %v1284
          %v1293 = vmul.f32 %v1252, %v1285
          %v1294 = vmul.f32 %v1254, %v1286
          %v1295 = vpack.c.bf16 %v1288, %v1287
          %v1296 = vpack.c.bf16 %v1290, %v1289
          %v1297 = vpack.c.bf16 %v1292, %v1291
          %v1298 = vpack.c.bf16 %v1294, %v1293
          %1299 = vrot.lane.b32.xlu0 %v528, 48
          %v1300 = vpop.permute.xlu0 %1299
          %1301 = vrot.lane.b32.xlu0 %v529, 48
          %v1302 = vpop.permute.xlu0 %1301
          %1303 = vrot.lane.b32.xlu0 %v530, 48
          %v1304 = vpop.permute.xlu0 %1303
          %1305 = vrot.lane.b32.xlu0 %v531, 48
          %v1306 = vpop.permute.xlu0 %1305
          %v1312 = vsel %vm634, %v1295, 0
          %v1315 = vsel %vm634, %v1296, 0
          %v1318 = vsel %vm634, %v1297, 0
          %v1321 = vsel %vm634, %v1298, 0
          %1323 = vmatprep.subr.bf16.mxu0 0
          %1324 = vmatpush1.bf16.msra.mxu0 %v1300
          %1325 = vmatprep.subr.bf16.mxu0 0
          %1326 = vmatpush1.bf16.msra.mxu0 %v1302
          %1327 = vmatprep.subr.bf16.mxu0 0
          %1328 = vmatpush1.bf16.msra.mxu0 %v1304
          %1329 = vmatprep.subr.bf16.mxu0 0
          %1330 = vmatpush1.bf16.msra.mxu0 %v1306
          %1331 = vmatprep.subr.bf16.mxu0 0
          %1332 = vmatpush1.bf16.msra.mxu0 0
          %1333 = vmatprep.subr.bf16.mxu0 0
          %1334 = vmatpush1.bf16.msra.mxu0 0
          %1335 = vmatprep.subr.bf16.mxu0 0
          %1336 = vmatpush1.bf16.msra.mxu0 0
          %1337 = vmatprep.subr.bf16.mxu0 0
          %1338 = vmatpush1.bf16.msra.mxu0 0
          %1339 = vmatprep.subr.bf16.mxu0 0
          %1340 = vmatpush1.bf16.msra.mxu0 0
          %1341 = vmatprep.subr.bf16.mxu0 0
          %1342 = vmatpush1.bf16.msra.mxu0 0
          %1343 = vmatprep.subr.bf16.mxu0 0
          %1344 = vmatpush1.bf16.msra.mxu0 0
          %1345 = vmatprep.subr.bf16.mxu0 0
          %1346 = vmatpush1.bf16.msra.mxu0 0
          %1347 = vmatprep.subr.bf16.mxu0 0
          %1348 = vmatpush1.bf16.msra.mxu0 0
          %1349 = vmatprep.subr.bf16.mxu0 0
          %1350 = vmatpush1.bf16.msra.mxu0 0
          %1351 = vmatprep.subr.bf16.mxu0 0
          %1352 = vmatpush1.bf16.msra.mxu0 0
          %1353 = vmatprep.subr.bf16.mxu0 0
          %1354 = vmatpush1.bf16.msra.mxu0 0
          %1355 = vmatprep.mubr.bf16.mxu0 0
          %1356 = vmatmul.mubr.bf16.gmra.mrb[0].mxu0 %v1312
          %v1357 = vpop.f32.mrb[0].mxu0
          %v1358 = vadd.f32 0.0, %v1357
          %v1359 = vpop.f32.mrb[0].mxu0
          %v1360 = vpop.f32.mrb[0].mxu0
          %v1361 = vadd.f32 0.0, %v1360
          %v1362 = vpop.f32.mrb[0].mxu0
          %1363 = vmatprep.mubr.bf16.mxu0 0
          %1364 = vmatmul.mubr.bf16.gmra.mrb[0].mxu0 %v1315
          %v1365 = vpop.f32.mrb[0].mxu0
          %v1366 = vadd.f32 0.0, %v1365
          %v1367 = vpop.f32.mrb[0].mxu0
          %v1368 = vpop.f32.mrb[0].mxu0
          %v1369 = vadd.f32 0.0, %v1368
          %v1370 = vpop.f32.mrb[0].mxu0
          %1371 = vmatprep.mubr.bf16.mxu0 0
          %1372 = vmatmul.mubr.bf16.gmra.mrb[0].mxu0 %v1318
          %v1373 = vpop.f32.mrb[0].mxu0
          %v1374 = vadd.f32 0.0, %v1373
          %v1375 = vpop.f32.mrb[0].mxu0
          %v1376 = vpop.f32.mrb[0].mxu0
          %v1377 = vadd.f32 0.0, %v1376
          %v1378 = vpop.f32.mrb[0].mxu0
          %1379 = vmatprep.mubr.bf16.mxu0 0
          %1380 = vmatmul.mubr.bf16.gmra.mrb[0].mxu0 %v1321
          %v1381 = vpop.f32.mrb[0].mxu0
          %v1382 = vadd.f32 0.0, %v1381
          %v1383 = vpop.f32.mrb[0].mxu0
          %v1384 = vpop.f32.mrb[0].mxu0
          %v1385 = vadd.f32 0.0, %v1384
          %v1386 = vpop.f32.mrb[0].mxu0
          %1387 = vdwg.mxu0
          %1388 = vrot.lane.b32.xlu0 %v528, 104
          %v1389 = vpop.permute.xlu0 %1388
          %1390 = vrot.lane.b32.xlu0 %v529, 104
          %v1391 = vpop.permute.xlu0 %1390
          %1392 = vrot.lane.b32.xlu0 %v530, 104
          %v1393 = vpop.permute.xlu0 %1392
          %1394 = vrot.lane.b32.xlu0 %v531, 104
          %v1395 = vpop.permute.xlu0 %1394
          %1396 = vrot.lane.b32.xlu0 %v528, 72
          %v1397 = vpop.permute.xlu0 %1396
          %1398 = vrot.lane.b32.xlu0 %v529, 72
          %v1399 = vpop.permute.xlu0 %1398
          %1400 = vrot.lane.b32.xlu0 %v530, 72
          %v1401 = vpop.permute.xlu0 %1400
          %1402 = vrot.lane.b32.xlu0 %v531, 72
          %v1403 = vpop.permute.xlu0 %1402
          %v1405 = vsel %vm544, %v1389, 0
          %v1408 = vsel %vm544, %v1391, 0
          %v1411 = vsel %vm544, %v1393, 0
          %v1414 = vsel %vm544, %v1395, 0
          %v1417 = vsel %vm544, %v1397, 0
          %v1420 = vsel %vm544, %v1399, 0
          %v1423 = vsel %vm544, %v1401, 0
          %v1426 = vsel %vm544, %v1403, 0
          %1428 = vmatprep.subr.bf16.mxu0 0
          %1429 = vmatpush1.bf16.xpose.msra.mxu0 %v1417
          %1430 = vmatprep.subr.bf16.mxu0 0
          %1431 = vmatpush1.bf16.xpose.msra.mxu0 %v1420
          %1432 = vmatprep.subr.bf16.mxu0 0
          %1433 = vmatpush1.bf16.xpose.msra.mxu0 %v1423
          %1434 = vmatprep.subr.bf16.mxu0 0
          %1435 = vmatpush1.bf16.xpose.msra.mxu0 %v1426
          %1436 = vmatprep.subr.bf16.mxu0 0
          %1437 = vmatpush1.bf16.xpose.msra.mxu0 0
          %1438 = vmatprep.subr.bf16.mxu0 0
          %1439 = vmatpush1.bf16.xpose.msra.mxu0 0
          %1440 = vmatprep.subr.bf16.mxu0 0
          %1441 = vmatpush1.bf16.xpose.msra.mxu0 0
          %1442 = vmatprep.subr.bf16.mxu0 0
          %1443 = vmatpush1.bf16.xpose.msra.mxu0 0
          %1444 = vmatprep.subr.bf16.mxu0 0
          %1445 = vmatpush1.bf16.xpose.msra.mxu0 0
          %1446 = vmatprep.subr.bf16.mxu0 0
          %1447 = vmatpush1.bf16.xpose.msra.mxu0 0
          %1448 = vmatprep.subr.bf16.mxu0 0
          %1449 = vmatpush1.bf16.xpose.msra.mxu0 0
          %1450 = vmatprep.subr.bf16.mxu0 0
          %1451 = vmatpush1.bf16.xpose.msra.mxu0 0
          %1452 = vmatprep.subr.bf16.mxu0 0
          %1453 = vmatpush1.bf16.xpose.msra.mxu0 0
          %1454 = vmatprep.subr.bf16.mxu0 0
          %1455 = vmatpush1.bf16.xpose.msra.mxu0 0
          %1456 = vmatprep.subr.bf16.mxu0 0
          %1457 = vmatpush1.bf16.xpose.msra.mxu0 0
          %1458 = vmatprep.subr.bf16.mxu0 0
          %1459 = vmatpush1.bf16.xpose.msra.mxu0 0
          %1460 = vmatprep.mubr.bf16.mxu0 0
          %1461 = vmatmul.mubr.bf16.gmra.mrb[0].mxu0 %v1405
          %v1462 = vpop.f32.mrb[0].mxu0
          %v1463 = vadd.f32 0.0, %v1462
          %v1464 = vpop.f32.mrb[0].mxu0
          %v1465 = vpop.f32.mrb[0].mxu0
          %v1466 = vadd.f32 0.0, %v1465
          %v1467 = vpop.f32.mrb[0].mxu0
          %1468 = vmatprep.mubr.bf16.mxu0 0
          %1469 = vmatmul.mubr.bf16.gmra.mrb[0].mxu0 %v1408
          %v1470 = vpop.f32.mrb[0].mxu0
          %v1471 = vadd.f32 0.0, %v1470
          %v1472 = vpop.f32.mrb[0].mxu0
          %v1473 = vpop.f32.mrb[0].mxu0
          %v1474 = vadd.f32 0.0, %v1473
          %v1475 = vpop.f32.mrb[0].mxu0
          %1476 = vmatprep.mubr.bf16.mxu0 0
          %1477 = vmatmul.mubr.bf16.gmra.mrb[0].mxu0 %v1411
          %v1478 = vpop.f32.mrb[0].mxu0
          %v1479 = vadd.f32 0.0, %v1478
          %v1480 = vpop.f32.mrb[0].mxu0
          %v1481 = vpop.f32.mrb[0].mxu0
          %v1482 = vadd.f32 0.0, %v1481
          %v1483 = vpop.f32.mrb[0].mxu0
          %1484 = vmatprep.mubr.bf16.mxu0 0
          %1485 = vmatmul.mubr.bf16.gmra.mrb[0].mxu0 %v1414
          %v1486 = vpop.f32.mrb[0].mxu0
          %v1487 = vadd.f32 0.0, %v1486
          %v1488 = vpop.f32.mrb[0].mxu0
          %v1489 = vpop.f32.mrb[0].mxu0
          %v1490 = vadd.f32 0.0, %v1489
          %v1491 = vpop.f32.mrb[0].mxu0
          %1492 = vdwg.mxu0
          %v1493 = vsel %vm634, %v1463, -inf
          %1494 = vmax.xlane.f32.xlu0 %v1493
          %v1495 = vpop.xlane.xlu0 %1494
          %v1496 = vsel %vm634, %v1466, -inf
          %1497 = vmax.xlane.f32.xlu0 %v1496
          %v1498 = vpop.xlane.xlu0 %1497
          %v1499 = vsel %vm634, %v1471, -inf
          %1500 = vmax.xlane.f32.xlu0 %v1499
          %v1501 = vpop.xlane.xlu0 %1500
          %v1502 = vsel %vm634, %v1474, -inf
          %1503 = vmax.xlane.f32.xlu0 %v1502
          %v1504 = vpop.xlane.xlu0 %1503
          %v1505 = vsel %vm634, %v1479, -inf
          %1506 = vmax.xlane.f32.xlu0 %v1505
          %v1507 = vpop.xlane.xlu0 %1506
          %v1508 = vsel %vm634, %v1482, -inf
          %1509 = vmax.xlane.f32.xlu0 %v1508
          %v1510 = vpop.xlane.xlu0 %1509
          %v1511 = vsel %vm634, %v1487, -inf
          %1512 = vmax.xlane.f32.xlu0 %v1511
          %v1513 = vpop.xlane.xlu0 %1512
          %v1514 = vsel %vm634, %v1490, -inf
          %1515 = vmax.xlane.f32.xlu0 %v1514
          %v1516 = vpop.xlane.xlu0 %1515
          %v1517 = vsub.f32 %v1463, %v1495
          %v1518 = vsub.f32 %v1466, %v1498
          %v1519 = vsub.f32 %v1471, %v1501
          %v1520 = vsub.f32 %v1474, %v1504
          %v1521 = vsub.f32 %v1479, %v1507
          %v1522 = vsub.f32 %v1482, %v1510
          %v1523 = vsub.f32 %v1487, %v1513
          %v1524 = vsub.f32 %v1490, %v1516
          %v1525 = vmul.f32 %v1517, 1.442695
          %v1526 = vpow.pop %v1525
          %v1527 = vmul.f32 %v1518, 1.442695
          %v1528 = vpow.pop %v1527
          %v1529 = vmul.f32 %v1519, 1.442695
          %v1530 = vpow.pop %v1529
          %v1531 = vmul.f32 %v1520, 1.442695
          %v1532 = vpow.pop %v1531
          %v1533 = vmul.f32 %v1521, 1.442695
          %v1534 = vpow.pop %v1533
          %v1535 = vmul.f32 %v1522, 1.442695
          %v1536 = vpow.pop %v1535
          %v1537 = vmul.f32 %v1523, 1.442695
          %v1538 = vpow.pop %v1537
          %v1539 = vmul.f32 %v1524, 1.442695
          %v1540 = vpow.pop %v1539
          %v1541 = vsel %vm634, %v1526, 0.0
          %1542 = vadd.xlane.f32.xlu0 %v1541
          %v1543 = vpop.xlane.xlu0 %1542
          %v1544 = vsel %vm634, %v1528, 0.0
          %1545 = vadd.xlane.f32.xlu0 %v1544
          %v1546 = vpop.xlane.xlu0 %1545
          %v1547 = vsel %vm634, %v1530, 0.0
          %1548 = vadd.xlane.f32.xlu0 %v1547
          %v1549 = vpop.xlane.xlu0 %1548
          %v1550 = vsel %vm634, %v1532, 0.0
          %1551 = vadd.xlane.f32.xlu0 %v1550
          %v1552 = vpop.xlane.xlu0 %1551
          %v1553 = vsel %vm634, %v1534, 0.0
          %1554 = vadd.xlane.f32.xlu0 %v1553
          %v1555 = vpop.xlane.xlu0 %1554
          %v1556 = vsel %vm634, %v1536, 0.0
          %1557 = vadd.xlane.f32.xlu0 %v1556
          %v1558 = vpop.xlane.xlu0 %1557
          %v1559 = vsel %vm634, %v1538, 0.0
          %1560 = vadd.xlane.f32.xlu0 %v1559
          %v1561 = vpop.xlane.xlu0 %1560
          %v1562 = vsel %vm634, %v1540, 0.0
          %1563 = vadd.xlane.f32.xlu0 %v1562
          %v1564 = vpop.xlane.xlu0 %1563
          %v1565 = vrcp.pop %v1543
          %v1566 = vrcp.pop %v1546
          %v1567 = vrcp.pop %v1549
          %v1568 = vrcp.pop %v1552
          %v1569 = vrcp.pop %v1555
          %v1570 = vrcp.pop %v1558
          %v1571 = vrcp.pop %v1561
          %v1572 = vrcp.pop %v1564
          %v1573 = vmul.f32 %v1526, %v1565
          %v1574 = vmul.f32 %v1528, %v1566
          %v1575 = vmul.f32 %v1530, %v1567
          %v1576 = vmul.f32 %v1532, %v1568
          %v1577 = vmul.f32 %v1534, %v1569
          %v1578 = vmul.f32 %v1536, %v1570
          %v1579 = vmul.f32 %v1538, %v1571
          %v1580 = vmul.f32 %v1540, %v1572
          %v1581 = vpack.c.bf16 %v1574, %v1573
          %v1582 = vpack.c.bf16 %v1576, %v1575
          %v1583 = vpack.c.bf16 %v1578, %v1577
          %v1584 = vpack.c.bf16 %v1580, %v1579
          %1585 = vrot.lane.b32.xlu0 %v528, 40
          %v1586 = vpop.permute.xlu0 %1585
          %1587 = vrot.lane.b32.xlu0 %v529, 40
          %v1588 = vpop.permute.xlu0 %1587
          %1589 = vrot.lane.b32.xlu0 %v530, 40
          %v1590 = vpop.permute.xlu0 %1589
          %1591 = vrot.lane.b32.xlu0 %v531, 40
          %v1592 = vpop.permute.xlu0 %1591
          %v1598 = vsel %vm634, %v1581, 0
          %v1601 = vsel %vm634, %v1582, 0
          %v1604 = vsel %vm634, %v1583, 0
          %v1607 = vsel %vm634, %v1584, 0
          %1609 = vmatprep.subr.bf16.mxu0 0
          %1610 = vmatpush1.bf16.msra.mxu0 %v1586
          %1611 = vmatprep.subr.bf16.mxu0 0
          %1612 = vmatpush1.bf16.msra.mxu0 %v1588
          %1613 = vmatprep.subr.bf16.mxu0 0
          %1614 = vmatpush1.bf16.msra.mxu0 %v1590
          %1615 = vmatprep.subr.bf16.mxu0 0
          %1616 = vmatpush1.bf16.msra.mxu0 %v1592
          %1617 = vmatprep.subr.bf16.mxu0 0
          %1618 = vmatpush1.bf16.msra.mxu0 0
          %1619 = vmatprep.subr.bf16.mxu0 0
          %1620 = vmatpush1.bf16.msra.mxu0 0
          %1621 = vmatprep.subr.bf16.mxu0 0
          %1622 = vmatpush1.bf16.msra.mxu0 0
          %1623 = vmatprep.subr.bf16.mxu0 0
          %1624 = vmatpush1.bf16.msra.mxu0 0
          %1625 = vmatprep.subr.bf16.mxu0 0
          %1626 = vmatpush1.bf16.msra.mxu0 0
          %1627 = vmatprep.subr.bf16.mxu0 0
          %1628 = vmatpush1.bf16.msra.mxu0 0
          %1629 = vmatprep.subr.bf16.mxu0 0
          %1630 = vmatpush1.bf16.msra.mxu0 0
          %1631 = vmatprep.subr.bf16.mxu0 0
          %1632 = vmatpush1.bf16.msra.mxu0 0
          %1633 = vmatprep.subr.bf16.mxu0 0
          %1634 = vmatpush1.bf16.msra.mxu0 0
          %1635 = vmatprep.subr.bf16.mxu0 0
          %1636 = vmatpush1.bf16.msra.mxu0 0
          %1637 = vmatprep.subr.bf16.mxu0 0
          %1638 = vmatpush1.bf16.msra.mxu0 0
          %1639 = vmatprep.subr.bf16.mxu0 0
          %1640 = vmatpush1.bf16.msra.mxu0 0
          %1641 = vmatprep.mubr.bf16.mxu0 0
          %1642 = vmatmul.mubr.bf16.gmra.mrb[0].mxu0 %v1598
          %v1643 = vpop.f32.mrb[0].mxu0
          %v1644 = vadd.f32 0.0, %v1643
          %v1645 = vpop.f32.mrb[0].mxu0
          %v1646 = vpop.f32.mrb[0].mxu0
          %v1647 = vadd.f32 0.0, %v1646
          %v1648 = vpop.f32.mrb[0].mxu0
          %1649 = vmatprep.mubr.bf16.mxu0 0
          %1650 = vmatmul.mubr.bf16.gmra.mrb[0].mxu0 %v1601
          %v1651 = vpop.f32.mrb[0].mxu0
          %v1652 = vadd.f32 0.0, %v1651
          %v1653 = vpop.f32.mrb[0].mxu0
          %v1654 = vpop.f32.mrb[0].mxu0
          %v1655 = vadd.f32 0.0, %v1654
          %v1656 = vpop.f32.mrb[0].mxu0
          %1657 = vmatprep.mubr.bf16.mxu0 0
          %1658 = vmatmul.mubr.bf16.gmra.mrb[0].mxu0 %v1604
          %v1659 = vpop.f32.mrb[0].mxu0
          %v1660 = vadd.f32 0.0, %v1659
          %v1661 = vpop.f32.mrb[0].mxu0
          %v1662 = vpop.f32.mrb[0].mxu0
          %v1663 = vadd.f32 0.0, %v1662
          %v1664 = vpop.f32.mrb[0].mxu0
          %1665 = vmatprep.mubr.bf16.mxu0 0
          %1666 = vmatmul.mubr.bf16.gmra.mrb[0].mxu0 %v1607
          %v1667 = vpop.f32.mrb[0].mxu0
          %v1668 = vadd.f32 0.0, %v1667
          %v1669 = vpop.f32.mrb[0].mxu0
          %v1670 = vpop.f32.mrb[0].mxu0
          %v1671 = vadd.f32 0.0, %v1670
          %v1672 = vpop.f32.mrb[0].mxu0
          %1673 = vdwg.mxu0
          %1682 = vrot.lane.b32.xlu0 %v1072, 8
          %v1683 = vpop.permute.xlu0 %1682
          %1684 = vrot.lane.b32.xlu0 %v1075, 8
          %v1685 = vpop.permute.xlu0 %1684
          %1686 = vrot.lane.b32.xlu0 %v1080, 8
          %v1687 = vpop.permute.xlu0 %1686
          %1688 = vrot.lane.b32.xlu0 %v1083, 8
          %v1689 = vpop.permute.xlu0 %1688
          %1690 = vrot.lane.b32.xlu0 %v1088, 8
          %v1691 = vpop.permute.xlu0 %1690
          %1692 = vrot.lane.b32.xlu0 %v1091, 8
          %v1693 = vpop.permute.xlu0 %1692
          %1694 = vrot.lane.b32.xlu0 %v1096, 8
          %v1695 = vpop.permute.xlu0 %1694
          %1696 = vrot.lane.b32.xlu0 %v1099, 8
          %v1697 = vpop.permute.xlu0 %1696
          %1714 = vrot.lane.b32.xlu0 %v1358, 16
          %v1715 = vpop.permute.xlu0 %1714
          %1716 = vrot.lane.b32.xlu0 %v1361, 16
          %v1717 = vpop.permute.xlu0 %1716
          %1718 = vrot.lane.b32.xlu0 %v1366, 16
          %v1719 = vpop.permute.xlu0 %1718
          %1720 = vrot.lane.b32.xlu0 %v1369, 16
          %v1721 = vpop.permute.xlu0 %1720
          %1722 = vrot.lane.b32.xlu0 %v1374, 16
          %v1723 = vpop.permute.xlu0 %1722
          %1724 = vrot.lane.b32.xlu0 %v1377, 16
          %v1725 = vpop.permute.xlu0 %1724
          %1726 = vrot.lane.b32.xlu0 %v1382, 16
          %v1727 = vpop.permute.xlu0 %1726
          %1728 = vrot.lane.b32.xlu0 %v1385, 16
          %v1729 = vpop.permute.xlu0 %1728
          %1746 = vrot.lane.b32.xlu0 %v1644, 24
          %v1747 = vpop.permute.xlu0 %1746
          %1748 = vrot.lane.b32.xlu0 %v1647, 24
          %v1749 = vpop.permute.xlu0 %1748
          %1750 = vrot.lane.b32.xlu0 %v1652, 24
          %v1751 = vpop.permute.xlu0 %1750
          %1752 = vrot.lane.b32.xlu0 %v1655, 24
          %v1753 = vpop.permute.xlu0 %1752
          %1754 = vrot.lane.b32.xlu0 %v1660, 24
          %v1755 = vpop.permute.xlu0 %1754
          %1756 = vrot.lane.b32.xlu0 %v1663, 24
          %v1757 = vpop.permute.xlu0 %1756
          %1758 = vrot.lane.b32.xlu0 %v1668, 24
          %v1759 = vpop.permute.xlu0 %1758
          %1760 = vrot.lane.b32.xlu0 %v1671, 24
          %v1761 = vpop.permute.xlu0 %1760
          %v1770 = vsel %vm544, %v786, %v1683
          %v1771 = vsel %vm544, %v789, %v1685
          %v1772 = vsel %vm544, %v794, %v1687
          %v1773 = vsel %vm544, %v797, %v1689
          %v1774 = vsel %vm544, %v802, %v1691
          %v1775 = vsel %vm544, %v805, %v1693
          %v1776 = vsel %vm544, %v810, %v1695
          %v1777 = vsel %vm544, %v813, %v1697
          %vm1778 = vcmask 130048
          %v1779 = vsel %vm1778, %v1770, %v1715
          %v1780 = vsel %vm1778, %v1771, %v1717
          %v1781 = vsel %vm1778, %v1772, %v1719
          %v1782 = vsel %vm1778, %v1773, %v1721
          %v1783 = vsel %vm1778, %v1774, %v1723
          %v1784 = vsel %vm1778, %v1775, %v1725
          %v1785 = vsel %vm1778, %v1776, %v1727
          %v1786 = vsel %vm1778, %v1777, %v1729
          %vm1787 = vcmask 195584
          %v1788 = vsel %vm1787, %v1779, %v1747
          %v1789 = vsel %vm1787, %v1780, %v1749
          %v1790 = vsel %vm1787, %v1781, %v1751
          %v1791 = vsel %vm1787, %v1782, %v1753
          %v1792 = vsel %vm1787, %v1783, %v1755
          %v1793 = vsel %vm1787, %v1784, %v1757
          %v1794 = vsel %vm1787, %v1785, %v1759
          %v1795 = vsel %vm1787, %v1786, %v1761
          %v1796 = vpack.c.bf16 %v1789, %v1788
          %v1797 = vpack.c.bf16 %v1791, %v1790
          %v1798 = vpack.c.bf16 %v1793, %v1792
          %v1799 = vpack.c.bf16 %v1795, %v1794
          %v1800 = vlaneseq
          %v1801 = vshrl.u32 %v1800, 7
          %v1802 = vsub.s32 2, %v1801
          %v1803 = vrot.slane %v429, %v1802
          %v1808 = vunpack.c.l.b16 %v407
          %v1809 = vunpack.c.l.b16 %v408
          %v1810 = vunpack.c.l.b16 %v409
          %v1811 = vunpack.c.l.b16 %v410
          %v1812 = vpack.c.b16 %v1809, %v1808
          %v1813 = vpack.c.b16 %v1811, %v1810
          %v1817 = vsel %vm450, %v1796, 0
          %v1820 = vsel %vm450, %v1797, 0
          %v1823 = vsel %vm450, %v1798, 0
          %v1826 = vsel %vm450, %v1799, 0
          %1828 = vmatprep.subr.bf16.mxu0 0
          %1829 = vmatpush1.bf16.msra.mxu0 %v1812
          %1830 = vmatprep.subr.bf16.mxu0 0
          %1831 = vmatpush1.bf16.msra.mxu0 %v1813
          %1832 = vmatprep.subr.bf16.mxu0 0
          %1833 = vmatpush1.bf16.msra.mxu0 0
          %1834 = vmatprep.subr.bf16.mxu0 0
          %1835 = vmatpush1.bf16.msra.mxu0 0
          %1836 = vmatprep.subr.bf16.mxu0 0
          %1837 = vmatpush1.bf16.msra.mxu0 0
          %1838 = vmatprep.subr.bf16.mxu0 0
          %1839 = vmatpush1.bf16.msra.mxu0 0
          %1840 = vmatprep.subr.bf16.mxu0 0
          %1841 = vmatpush1.bf16.msra.mxu0 0
          %1842 = vmatprep.subr.bf16.mxu0 0
          %1843 = vmatpush1.bf16.msra.mxu0 0
          %1844 = vmatprep.subr.bf16.mxu0 0
          %1845 = vmatpush1.bf16.msra.mxu0 0
          %1846 = vmatprep.subr.bf16.mxu0 0
          %1847 = vmatpush1.bf16.msra.mxu0 0
          %1848 = vmatprep.subr.bf16.mxu0 0
          %1849 = vmatpush1.bf16.msra.mxu0 0
          %1850 = vmatprep.subr.bf16.mxu0 0
          %1851 = vmatpush1.bf16.msra.mxu0 0
          %1852 = vmatprep.subr.bf16.mxu0 0
          %1853 = vmatpush1.bf16.msra.mxu0 0
          %1854 = vmatprep.subr.bf16.mxu0 0
          %1855 = vmatpush1.bf16.msra.mxu0 0
          %1856 = vmatprep.subr.bf16.mxu0 0
          %1857 = vmatpush1.bf16.msra.mxu0 0
          %1858 = vmatprep.subr.bf16.mxu0 0
          %1859 = vmatpush1.bf16.msra.mxu0 0
          %1860 = vmatprep.mubr.bf16.mxu0 0
          %1861 = vmatmul.mubr.bf16.gmra.mrb[0].mxu0 %v1817
          %v1862 = vpop.f32.mrb[0].mxu0
          %v1863 = vadd.f32 %v1803, %v1862
          %v1864 = vpop.f32.mrb[0].mxu0
          %v1865 = vpop.f32.mrb[0].mxu0
          %v1866 = vadd.f32 %v1803, %v1865
          %v1867 = vpop.f32.mrb[0].mxu0
          %1868 = vmatprep.mubr.bf16.mxu0 0
          %1869 = vmatmul.mubr.bf16.gmra.mrb[0].mxu0 %v1820
          %v1870 = vpop.f32.mrb[0].mxu0
          %v1871 = vadd.f32 %v1803, %v1870
          %v1872 = vpop.f32.mrb[0].mxu0
          %v1873 = vpop.f32.mrb[0].mxu0
          %v1874 = vadd.f32 %v1803, %v1873
          %v1875 = vpop.f32.mrb[0].mxu0
          %1876 = vmatprep.mubr.bf16.mxu0 0
          %1877 = vmatmul.mubr.bf16.gmra.mrb[0].mxu0 %v1823
          %v1878 = vpop.f32.mrb[0].mxu0
          %v1879 = vadd.f32 %v1803, %v1878
          %v1880 = vpop.f32.mrb[0].mxu0
          %v1881 = vpop.f32.mrb[0].mxu0
          %v1882 = vadd.f32 %v1803, %v1881
          %v1883 = vpop.f32.mrb[0].mxu0
          %1884 = vmatprep.mubr.bf16.mxu0 0
          %1885 = vmatmul.mubr.bf16.gmra.mrb[0].mxu0 %v1826
          %v1886 = vpop.f32.mrb[0].mxu0
          %v1887 = vadd.f32 %v1803, %v1886
          %v1888 = vpop.f32.mrb[0].mxu0
          %v1889 = vpop.f32.mrb[0].mxu0
          %v1890 = vadd.f32 %v1803, %v1889
          %v1891 = vpop.f32.mrb[0].mxu0
          %1892 = vdwg.mxu0
          %v1893 = vadd.f32 %v390, %v1863
          %v1894 = vadd.f32 %v391, %v1866
          %v1895 = vadd.f32 %v392, %v1871
          %v1896 = vadd.f32 %v393, %v1874
          %v1897 = vadd.f32 %v394, %v1879
          %v1898 = vadd.f32 %v395, %v1882
          %v1899 = vadd.f32 %v396, %v1887
          %v1900 = vadd.f32 %v397, %v1890
          %v1901 = vsel %vm450, %v1893, 0.0
          %1902 = vadd.xlane.f32.xlu0 %v1901
          %v1903 = vpop.xlane.xlu0 %1902
          %v1904 = vsel %vm450, %v1894, 0.0
          %1905 = vadd.xlane.f32.xlu0 %v1904
          %v1906 = vpop.xlane.xlu0 %1905
          %v1907 = vsel %vm450, %v1895, 0.0
          %1908 = vadd.xlane.f32.xlu0 %v1907
          %v1909 = vpop.xlane.xlu0 %1908
          %v1910 = vsel %vm450, %v1896, 0.0
          %1911 = vadd.xlane.f32.xlu0 %v1910
          %v1912 = vpop.xlane.xlu0 %1911
          %v1913 = vsel %vm450, %v1897, 0.0
          %1914 = vadd.xlane.f32.xlu0 %v1913
          %v1915 = vpop.xlane.xlu0 %1914
          %v1916 = vsel %vm450, %v1898, 0.0
          %1917 = vadd.xlane.f32.xlu0 %v1916
          %v1918 = vpop.xlane.xlu0 %1917
          %v1919 = vsel %vm450, %v1899, 0.0
          %1920 = vadd.xlane.f32.xlu0 %v1919
          %v1921 = vpop.xlane.xlu0 %1920
          %v1922 = vsel %vm450, %v1900, 0.0
          %1923 = vadd.xlane.f32.xlu0 %v1922
          %v1924 = vpop.xlane.xlu0 %1923
          %v1925 = vrcp.pop 32.0
          %v1926 = vmul.f32 %v1903, %v1925
          %v1927 = vmul.f32 %v1906, %v1925
          %v1928 = vmul.f32 %v1909, %v1925
          %v1929 = vmul.f32 %v1912, %v1925
          %v1930 = vmul.f32 %v1915, %v1925
          %v1931 = vmul.f32 %v1918, %v1925
          %v1932 = vmul.f32 %v1921, %v1925
          %v1933 = vmul.f32 %v1924, %v1925
          %v1934 = vsub.f32 %v1893, %v1926
          %v1935 = vsub.f32 %v1894, %v1927
          %v1936 = vsub.f32 %v1895, %v1928
          %v1937 = vsub.f32 %v1896, %v1929
          %v1938 = vsub.f32 %v1897, %v1930
          %v1939 = vsub.f32 %v1898, %v1931
          %v1940 = vsub.f32 %v1899, %v1932
          %v1941 = vsub.f32 %v1900, %v1933
          %v1942 = vmul.f32 %v1934, %v1934
          %v1943 = vmul.f32 %v1935, %v1935
          %v1944 = vmul.f32 %v1936, %v1936
          %v1945 = vmul.f32 %v1937, %v1937
          %v1946 = vmul.f32 %v1938, %v1938
          %v1947 = vmul.f32 %v1939, %v1939
          %v1948 = vmul.f32 %v1940, %v1940
          %v1949 = vmul.f32 %v1941, %v1941
          %v1950 = vsel %vm450, %v1942, 0.0
          %1951 = vadd.xlane.f32.xlu0 %v1950
          %v1952 = vpop.xlane.xlu0 %1951
          %v1953 = vsel %vm450, %v1943, 0.0
          %1954 = vadd.xlane.f32.xlu0 %v1953
          %v1955 = vpop.xlane.xlu0 %1954
          %v1956 = vsel %vm450, %v1944, 0.0
          %1957 = vadd.xlane.f32.xlu0 %v1956
          %v1958 = vpop.xlane.xlu0 %1957
          %v1959 = vsel %vm450, %v1945, 0.0
          %1960 = vadd.xlane.f32.xlu0 %v1959
          %v1961 = vpop.xlane.xlu0 %1960
          %v1962 = vsel %vm450, %v1946, 0.0
          %1963 = vadd.xlane.f32.xlu0 %v1962
          %v1964 = vpop.xlane.xlu0 %1963
          %v1965 = vsel %vm450, %v1947, 0.0
          %1966 = vadd.xlane.f32.xlu0 %v1965
          %v1967 = vpop.xlane.xlu0 %1966
          %v1968 = vsel %vm450, %v1948, 0.0
          %1969 = vadd.xlane.f32.xlu0 %v1968
          %v1970 = vpop.xlane.xlu0 %1969
          %v1971 = vsel %vm450, %v1949, 0.0
          %1972 = vadd.xlane.f32.xlu0 %v1971
          %v1973 = vpop.xlane.xlu0 %1972
          %v1974 = vmul.f32 %v1952, %v1925
          %v1975 = vmul.f32 %v1955, %v1925
          %v1976 = vmul.f32 %v1958, %v1925
          %v1977 = vmul.f32 %v1961, %v1925
          %v1978 = vmul.f32 %v1964, %v1925
          %v1979 = vmul.f32 %v1967, %v1925
          %v1980 = vmul.f32 %v1970, %v1925
          %v1981 = vmul.f32 %v1973, %v1925
          %v1982 = vadd.f32 %v1974, 1e-05
          %v1983 = vadd.f32 %v1975, 1e-05
          %v1984 = vadd.f32 %v1976, 1e-05
          %v1985 = vadd.f32 %v1977, 1e-05
          %v1986 = vadd.f32 %v1978, 1e-05
          %v1987 = vadd.f32 %v1979, 1e-05
          %v1988 = vadd.f32 %v1980, 1e-05
          %v1989 = vadd.f32 %v1981, 1e-05
          %v1990 = vrsqrt.pop %v1982
          %v1991 = vrsqrt.pop %v1983
          %v1992 = vrsqrt.pop %v1984
          %v1993 = vrsqrt.pop %v1985
          %v1994 = vrsqrt.pop %v1986
          %v1995 = vrsqrt.pop %v1987
          %v1996 = vrsqrt.pop %v1988
          %v1997 = vrsqrt.pop %v1989
          %v1998 = vmul.f32 %v1934, %v1990
          %v1999 = vmul.f32 %v1935, %v1991
          %v2000 = vmul.f32 %v1936, %v1992
          %v2001 = vmul.f32 %v1937, %v1993
          %v2002 = vmul.f32 %v1938, %v1994
          %v2003 = vmul.f32 %v1939, %v1995
          %v2004 = vmul.f32 %v1940, %v1996
          %v2005 = vmul.f32 %v1941, %v1997
          %v2006 = vlaneseq
          %v2007 = vshrl.u32 %v2006, 7
          %v2008 = vsub.s32 3, %v2007
          %v2009 = vrot.slane %v429, %v2008
          %v2010 = vmul.f32 %v1998, %v2009
          %v2011 = vmul.f32 %v1999, %v2009
          %v2012 = vmul.f32 %v2000, %v2009
          %v2013 = vmul.f32 %v2001, %v2009
          %v2014 = vmul.f32 %v2002, %v2009
          %v2015 = vmul.f32 %v2003, %v2009
          %v2016 = vmul.f32 %v2004, %v2009
          %v2017 = vmul.f32 %v2005, %v2009
          %v2018 = vlaneseq
          %v2019 = vshrl.u32 %v2018, 7
          %v2020 = vsub.s32 4, %v2019
          %v2021 = vrot.slane %v429, %v2020
          %v2022 = vadd.f32 %v2010, %v2021
          %v2023 = vadd.f32 %v2011, %v2021
          %v2024 = vadd.f32 %v2012, %v2021
          %v2025 = vadd.f32 %v2013, %v2021
          %v2026 = vadd.f32 %v2014, %v2021
          %v2027 = vadd.f32 %v2015, %v2021
          %v2028 = vadd.f32 %v2016, %v2021
          %v2029 = vadd.f32 %v2017, %v2021
          %v2030 = vpack.c.bf16 %v2023, %v2022
          %v2031 = vpack.c.bf16 %v2025, %v2024
          %v2032 = vpack.c.bf16 %v2027, %v2026
          %v2033 = vpack.c.bf16 %v2029, %v2028
          %v2034 = vlaneseq
          %v2035 = vshrl.u32 %v2034, 7
          %v2036 = vsub.s32 1, %v2035
          %v2037 = vrot.slane %v429, %v2036
          %v2042 = vunpack.c.l.b16 %v413
          %v2043 = vunpack.c.l.b16 %v414
          %v2044 = vunpack.c.l.b16 %v415
          %v2045 = vunpack.c.l.b16 %v416
          %v2046 = vpack.c.b16 %v2043, %v2042
          %v2047 = vpack.c.b16 %v2045, %v2044
          %v2051 = vsel %vm450, %v2030, 0
          %v2054 = vsel %vm450, %v2031, 0
          %v2057 = vsel %vm450, %v2032, 0
          %v2060 = vsel %vm450, %v2033, 0
          %2062 = vmatprep.subr.bf16.mxu0 0
          %2063 = vmatpush1.bf16.msra.mxu0 %v2046
          %2064 = vmatprep.subr.bf16.mxu0 0
          %2065 = vmatpush1.bf16.msra.mxu0 %v2047
          %2066 = vmatprep.subr.bf16.mxu0 0
          %2067 = vmatpush1.bf16.msra.mxu0 0
          %2068 = vmatprep.subr.bf16.mxu0 0
          %2069 = vmatpush1.bf16.msra.mxu0 0
          %2070 = vmatprep.subr.bf16.mxu0 0
          %2071 = vmatpush1.bf16.msra.mxu0 0
          %2072 = vmatprep.subr.bf16.mxu0 0
          %2073 = vmatpush1.bf16.msra.mxu0 0
          %2074 = vmatprep.subr.bf16.mxu0 0
          %2075 = vmatpush1.bf16.msra.mxu0 0
          %2076 = vmatprep.subr.bf16.mxu0 0
          %2077 = vmatpush1.bf16.msra.mxu0 0
          %2078 = vmatprep.subr.bf16.mxu0 0
          %2079 = vmatpush1.bf16.msra.mxu0 0
          %2080 = vmatprep.subr.bf16.mxu0 0
          %2081 = vmatpush1.bf16.msra.mxu0 0
          %2082 = vmatprep.subr.bf16.mxu0 0
          %2083 = vmatpush1.bf16.msra.mxu0 0
          %2084 = vmatprep.subr.bf16.mxu0 0
          %2085 = vmatpush1.bf16.msra.mxu0 0
          %2086 = vmatprep.subr.bf16.mxu0 0
          %2087 = vmatpush1.bf16.msra.mxu0 0
          %2088 = vmatprep.subr.bf16.mxu0 0
          %2089 = vmatpush1.bf16.msra.mxu0 0
          %2090 = vmatprep.subr.bf16.mxu0 0
          %2091 = vmatpush1.bf16.msra.mxu0 0
          %2092 = vmatprep.subr.bf16.mxu0 0
          %2093 = vmatpush1.bf16.msra.mxu0 0
          %2094 = vmatprep.mubr.bf16.mxu0 0
          %2095 = vmatmul.mubr.bf16.gmra.mrb[0].mxu0 %v2051
          %v2096 = vpop.f32.mrb[0].mxu0
          %v2097 = vadd.f32 %v2037, %v2096
          %v2098 = vpop.f32.mrb[0].mxu0
          %v2099 = vpop.f32.mrb[0].mxu0
          %v2100 = vadd.f32 %v2037, %v2099
          %v2101 = vpop.f32.mrb[0].mxu0
          %2102 = vmatprep.mubr.bf16.mxu0 0
          %2103 = vmatmul.mubr.bf16.gmra.mrb[0].mxu0 %v2054
          %v2104 = vpop.f32.mrb[0].mxu0
          %v2105 = vadd.f32 %v2037, %v2104
          %v2106 = vpop.f32.mrb[0].mxu0
          %v2107 = vpop.f32.mrb[0].mxu0
          %v2108 = vadd.f32 %v2037, %v2107
          %v2109 = vpop.f32.mrb[0].mxu0
          %2110 = vmatprep.mubr.bf16.mxu0 0
          %2111 = vmatmul.mubr.bf16.gmra.mrb[0].mxu0 %v2057
          %v2112 = vpop.f32.mrb[0].mxu0
          %v2113 = vadd.f32 %v2037, %v2112
          %v2114 = vpop.f32.mrb[0].mxu0
          %v2115 = vpop.f32.mrb[0].mxu0
          %v2116 = vadd.f32 %v2037, %v2115
          %v2117 = vpop.f32.mrb[0].mxu0
          %2118 = vmatprep.mubr.bf16.mxu0 0
          %2119 = vmatmul.mubr.bf16.gmra.mrb[0].mxu0 %v2060
          %v2120 = vpop.f32.mrb[0].mxu0
          %v2121 = vadd.f32 %v2037, %v2120
          %v2122 = vpop.f32.mrb[0].mxu0
          %v2123 = vpop.f32.mrb[0].mxu0
          %v2124 = vadd.f32 %v2037, %v2123
          %v2125 = vpop.f32.mrb[0].mxu0
          %2126 = vdwg.mxu0
          %v2127 = vmax.f32 %v2097, 0.0
          %v2128 = vmax.f32 %v2100, 0.0
          %v2129 = vmax.f32 %v2105, 0.0
          %v2130 = vmax.f32 %v2108, 0.0
          %v2131 = vmax.f32 %v2113, 0.0
          %v2132 = vmax.f32 %v2116, 0.0
          %v2133 = vmax.f32 %v2121, 0.0
          %v2134 = vmax.f32 %v2124, 0.0
          %v2135 = vpack.c.bf16 %v2128, %v2127
          %v2136 = vpack.c.bf16 %v2130, %v2129
          %v2137 = vpack.c.bf16 %v2132, %v2131
          %v2138 = vpack.c.bf16 %v2134, %v2133
          %v2139 = vlaneseq
          %v2140 = vshrl.u32 %v2139, 7
          %v2141 = vsub.s32 7, %v2140
          %v2142 = vrot.slane %v429, %v2141
          %v2151 = vunpack.c.l.b16 %v420
          %v2152 = vunpack.c.l.b16 %v421
          %v2153 = vunpack.c.l.b16 %v422
          %v2154 = vunpack.c.l.b16 %v423
          %v2155 = vunpack.c.l.b16 %v424
          %v2156 = vunpack.c.l.b16 %v425
          %v2157 = vunpack.c.l.b16 %v426
          %v2158 = vunpack.c.l.b16 %v427
          %v2159 = vpack.c.b16 %v2152, %v2151
          %v2160 = vpack.c.b16 %v2154, %v2153
          %v2161 = vpack.c.b16 %v2156, %v2155
          %v2162 = vpack.c.b16 %v2158, %v2157
          %v2168 = vsel %vm634, %v2135, 0
          %v2171 = vsel %vm634, %v2136, 0
          %v2174 = vsel %vm634, %v2137, 0
          %v2177 = vsel %vm634, %v2138, 0
          %2179 = vmatprep.subr.bf16.mxu0 0
          %2180 = vmatpush1.bf16.msra.mxu0 %v2159
          %2181 = vmatprep.subr.bf16.mxu0 0
          %2182 = vmatpush1.bf16.msra.mxu0 %v2160
          %2183 = vmatprep.subr.bf16.mxu0 0
          %2184 = vmatpush1.bf16.msra.mxu0 %v2161
          %2185 = vmatprep.subr.bf16.mxu0 0
          %2186 = vmatpush1.bf16.msra.mxu0 %v2162
          %2187 = vmatprep.subr.bf16.mxu0 0
          %2188 = vmatpush1.bf16.msra.mxu0 0
          %2189 = vmatprep.subr.bf16.mxu0 0
          %2190 = vmatpush1.bf16.msra.mxu0 0
          %2191 = vmatprep.subr.bf16.mxu0 0
          %2192 = vmatpush1.bf16.msra.mxu0 0
          %2193 = vmatprep.subr.bf16.mxu0 0
          %2194 = vmatpush1.bf16.msra.mxu0 0
          %2195 = vmatprep.subr.bf16.mxu0 0
          %2196 = vmatpush1.bf16.msra.mxu0 0
          %2197 = vmatprep.subr.bf16.mxu0 0
          %2198 = vmatpush1.bf16.msra.mxu0 0
          %2199 = vmatprep.subr.bf16.mxu0 0
          %2200 = vmatpush1.bf16.msra.mxu0 0
          %2201 = vmatprep.subr.bf16.mxu0 0
          %2202 = vmatpush1.bf16.msra.mxu0 0
          %2203 = vmatprep.subr.bf16.mxu0 0
          %2204 = vmatpush1.bf16.msra.mxu0 0
          %2205 = vmatprep.subr.bf16.mxu0 0
          %2206 = vmatpush1.bf16.msra.mxu0 0
          %2207 = vmatprep.subr.bf16.mxu0 0
          %2208 = vmatpush1.bf16.msra.mxu0 0
          %2209 = vmatprep.subr.bf16.mxu0 0
          %2210 = vmatpush1.bf16.msra.mxu0 0
          %2211 = vmatprep.mubr.bf16.mxu0 0
          %2212 = vmatmul.mubr.bf16.gmra.mrb[0].mxu0 %v2168
          %v2213 = vpop.f32.mrb[0].mxu0
          %v2214 = vadd.f32 %v2142, %v2213
          %v2215 = vpop.f32.mrb[0].mxu0
          %v2216 = vpop.f32.mrb[0].mxu0
          %v2217 = vadd.f32 %v2142, %v2216
          %v2218 = vpop.f32.mrb[0].mxu0
          %2219 = vmatprep.mubr.bf16.mxu0 0
          %2220 = vmatmul.mubr.bf16.gmra.mrb[0].mxu0 %v2171
          %v2221 = vpop.f32.mrb[0].mxu0
          %v2222 = vadd.f32 %v2142, %v2221
          %v2223 = vpop.f32.mrb[0].mxu0
          %v2224 = vpop.f32.mrb[0].mxu0
          %v2225 = vadd.f32 %v2142, %v2224
          %v2226 = vpop.f32.mrb[0].mxu0
          %2227 = vmatprep.mubr.bf16.mxu0 0
          %2228 = vmatmul.mubr.bf16.gmra.mrb[0].mxu0 %v2174
          %v2229 = vpop.f32.mrb[0].mxu0
          %v2230 = vadd.f32 %v2142, %v2229
          %v2231 = vpop.f32.mrb[0].mxu0
          %v2232 = vpop.f32.mrb[0].mxu0
          %v2233 = vadd.f32 %v2142, %v2232
          %v2234 = vpop.f32.mrb[0].mxu0
          %2235 = vmatprep.mubr.bf16.mxu0 0
          %2236 = vmatmul.mubr.bf16.gmra.mrb[0].mxu0 %v2177
          %v2237 = vpop.f32.mrb[0].mxu0
          %v2238 = vadd.f32 %v2142, %v2237
          %v2239 = vpop.f32.mrb[0].mxu0
          %v2240 = vpop.f32.mrb[0].mxu0
          %v2241 = vadd.f32 %v2142, %v2240
          %v2242 = vpop.f32.mrb[0].mxu0
          %2243 = vdwg.mxu0
          %v2244 = vadd.f32 %v2022, %v2214
          %v2245 = vadd.f32 %v2023, %v2217
          %v2246 = vadd.f32 %v2024, %v2222
          %v2247 = vadd.f32 %v2025, %v2225
          %v2248 = vadd.f32 %v2026, %v2230
          %v2249 = vadd.f32 %v2027, %v2233
          %v2250 = vadd.f32 %v2028, %v2238
          %v2251 = vadd.f32 %v2029, %v2241
          %v2252 = vsel %vm450, %v2244, 0.0
          %2253 = vadd.xlane.f32.xlu0 %v2252
          %v2254 = vpop.xlane.xlu0 %2253
          %v2255 = vsel %vm450, %v2245, 0.0
          %2256 = vadd.xlane.f32.xlu0 %v2255
          %v2257 = vpop.xlane.xlu0 %2256
          %v2258 = vsel %vm450, %v2246, 0.0
          %2259 = vadd.xlane.f32.xlu0 %v2258
          %v2260 = vpop.xlane.xlu0 %2259
          %v2261 = vsel %vm450, %v2247, 0.0
          %2262 = vadd.xlane.f32.xlu0 %v2261
          %v2263 = vpop.xlane.xlu0 %2262
          %v2264 = vsel %vm450, %v2248, 0.0
          %2265 = vadd.xlane.f32.xlu0 %v2264
          %v2266 = vpop.xlane.xlu0 %2265
          %v2267 = vsel %vm450, %v2249, 0.0
          %2268 = vadd.xlane.f32.xlu0 %v2267
          %v2269 = vpop.xlane.xlu0 %2268
          %v2270 = vsel %vm450, %v2250, 0.0
          %2271 = vadd.xlane.f32.xlu0 %v2270
          %v2272 = vpop.xlane.xlu0 %2271
          %v2273 = vsel %vm450, %v2251, 0.0
          %2274 = vadd.xlane.f32.xlu0 %v2273
          %v2275 = vpop.xlane.xlu0 %2274
          %v2276 = vmul.f32 %v2254, %v1925
          %v2277 = vmul.f32 %v2257, %v1925
          %v2278 = vmul.f32 %v2260, %v1925
          %v2279 = vmul.f32 %v2263, %v1925
          %v2280 = vmul.f32 %v2266, %v1925
          %v2281 = vmul.f32 %v2269, %v1925
          %v2282 = vmul.f32 %v2272, %v1925
          %v2283 = vmul.f32 %v2275, %v1925
          %v2284 = vsub.f32 %v2244, %v2276
          %v2285 = vsub.f32 %v2245, %v2277
          %v2286 = vsub.f32 %v2246, %v2278
          %v2287 = vsub.f32 %v2247, %v2279
          %v2288 = vsub.f32 %v2248, %v2280
          %v2289 = vsub.f32 %v2249, %v2281
          %v2290 = vsub.f32 %v2250, %v2282
          %v2291 = vsub.f32 %v2251, %v2283
          %v2292 = vmul.f32 %v2284, %v2284
          %v2293 = vmul.f32 %v2285, %v2285
          %v2294 = vmul.f32 %v2286, %v2286
          %v2295 = vmul.f32 %v2287, %v2287
          %v2296 = vmul.f32 %v2288, %v2288
          %v2297 = vmul.f32 %v2289, %v2289
          %v2298 = vmul.f32 %v2290, %v2290
          %v2299 = vmul.f32 %v2291, %v2291
          %v2300 = vsel %vm450, %v2292, 0.0
          %2301 = vadd.xlane.f32.xlu0 %v2300
          %v2302 = vpop.xlane.xlu0 %2301
          %v2303 = vsel %vm450, %v2293, 0.0
          %2304 = vadd.xlane.f32.xlu0 %v2303
          %v2305 = vpop.xlane.xlu0 %2304
          %v2306 = vsel %vm450, %v2294, 0.0
          %2307 = vadd.xlane.f32.xlu0 %v2306
          %v2308 = vpop.xlane.xlu0 %2307
          %v2309 = vsel %vm450, %v2295, 0.0
          %2310 = vadd.xlane.f32.xlu0 %v2309
          %v2311 = vpop.xlane.xlu0 %2310
          %v2312 = vsel %vm450, %v2296, 0.0
          %2313 = vadd.xlane.f32.xlu0 %v2312
          %v2314 = vpop.xlane.xlu0 %2313
          %v2315 = vsel %vm450, %v2297, 0.0
          %2316 = vadd.xlane.f32.xlu0 %v2315
          %v2317 = vpop.xlane.xlu0 %2316
          %v2318 = vsel %vm450, %v2298, 0.0
          %2319 = vadd.xlane.f32.xlu0 %v2318
          %v2320 = vpop.xlane.xlu0 %2319
          %v2321 = vsel %vm450, %v2299, 0.0
          %2322 = vadd.xlane.f32.xlu0 %v2321
          %v2323 = vpop.xlane.xlu0 %2322
          %v2324 = vmul.f32 %v2302, %v1925
          %v2325 = vmul.f32 %v2305, %v1925
          %v2326 = vmul.f32 %v2308, %v1925
          %v2327 = vmul.f32 %v2311, %v1925
          %v2328 = vmul.f32 %v2314, %v1925
          %v2329 = vmul.f32 %v2317, %v1925
          %v2330 = vmul.f32 %v2320, %v1925
          %v2331 = vmul.f32 %v2323, %v1925
          %v2332 = vadd.f32 %v2324, 1e-05
          %v2333 = vadd.f32 %v2325, 1e-05
          %v2334 = vadd.f32 %v2326, 1e-05
          %v2335 = vadd.f32 %v2327, 1e-05
          %v2336 = vadd.f32 %v2328, 1e-05
          %v2337 = vadd.f32 %v2329, 1e-05
          %v2338 = vadd.f32 %v2330, 1e-05
          %v2339 = vadd.f32 %v2331, 1e-05
          %v2340 = vrsqrt.pop %v2332
          %v2341 = vrsqrt.pop %v2333
          %v2342 = vrsqrt.pop %v2334
          %v2343 = vrsqrt.pop %v2335
          %v2344 = vrsqrt.pop %v2336
          %v2345 = vrsqrt.pop %v2337
          %v2346 = vrsqrt.pop %v2338
          %v2347 = vrsqrt.pop %v2339
          %v2348 = vmul.f32 %v2284, %v2340
          %v2349 = vmul.f32 %v2285, %v2341
          %v2350 = vmul.f32 %v2286, %v2342
          %v2351 = vmul.f32 %v2287, %v2343
          %v2352 = vmul.f32 %v2288, %v2344
          %v2353 = vmul.f32 %v2289, %v2345
          %v2354 = vmul.f32 %v2290, %v2346
          %v2355 = vmul.f32 %v2291, %v2347
          %v2356 = vlaneseq
          %v2357 = vshrl.u32 %v2356, 7
          %v2358 = vsub.s32 5, %v2357
          %v2359 = vrot.slane %v429, %v2358
          %v2360 = vmul.f32 %v2348, %v2359
          %v2361 = vmul.f32 %v2349, %v2359
          %v2362 = vmul.f32 %v2350, %v2359
          %v2363 = vmul.f32 %v2351, %v2359
          %v2364 = vmul.f32 %v2352, %v2359
          %v2365 = vmul.f32 %v2353, %v2359
          %v2366 = vmul.f32 %v2354, %v2359
          %v2367 = vmul.f32 %v2355, %v2359
          %v2368 = vlaneseq
          %v2369 = vshrl.u32 %v2368, 7
          %v2370 = vsub.s32 6, %v2369
          %v2371 = vrot.slane %v429, %v2370
          %v2372 = vadd.f32 %v2360, %v2371
          %v2373 = vadd.f32 %v2361, %v2371
          %v2374 = vadd.f32 %v2362, %v2371
          %v2375 = vadd.f32 %v2363, %v2371
          %v2376 = vadd.f32 %v2364, %v2371
          %v2377 = vadd.f32 %v2365, %v2371
          %v2378 = vadd.f32 %v2366, %v2371
          %v2379 = vadd.f32 %v2367, %v2371
        $region57: #{transformer_forward.1} parent=51 // loop_footer
          %s389 = sadd.s32 1, %s385
        $region58: #{transformer_forward.1} parent=51 // loop_footer_branch
          %384 = sbr.rel target = $region54
        $region59: #{transformer_forward.1} parent=51 // loop_exit
          _
        %vm2380 = vcmask 261120
        %v2381 = vsel %vm2380, %v390, -inf
        %v2382 = vsel %vm2380, %v391, -inf
        %v2383 = vsel %vm2380, %v392, -inf
        %v2384 = vsel %vm2380, %v393, -inf
        %v2385 = vsel %vm2380, %v394, -inf
        %v2386 = vmax.f32 %v2381, %v2385
        %v2387 = vsel %vm2380, %v395, -inf
        %v2388 = vmax.f32 %v2382, %v2387
        %v2389 = vsel %vm2380, %v396, -inf
        %v2390 = vmax.f32 %v2383, %v2389
        %v2391 = vsel %vm2380, %v397, -inf
        %v2392 = vmax.f32 %v2384, %v2391
        %v2393 = vmax.f32 %v2386, %v2388
        %v2394 = vmax.f32 %v2390, %v2392
        %v2395 = vmax.f32 %v2393, %v2394
        %v2396 = vrot.slane %v2395, 4
        %v2397 = vmax.f32 %v2395, %v2396
        %v2398 = vrot.slane %v2397, 2
        %v2399 = vmax.f32 %v2397, %v2398
        %v2400 = vrot.slane %v2399, 1
        %v2401 = vmax.f32 %v2399, %v2400
        %v2402 = vpack.c.bf16 %v2401, %v2401
        %v2403 = vld [vmem:[%s6] sm:$0xf]
        %v2404 = vld [vmem:[%s6 + $0x4] sm:$0xf]
        %v2405 = vld [vmem:[%s6 + $0x8] sm:$0xf]
        %v2406 = vld [vmem:[%s6 + $0xc] sm:$0xf]
        %v2407 = vld [vmem:[%s7] sm:$0x1]
        %v2412 = vunpack.c.l.b16 %v2403
        %v2413 = vunpack.c.l.b16 %v2404
        %v2414 = vunpack.c.l.b16 %v2405
        %v2415 = vunpack.c.l.b16 %v2406
        %v2416 = vpack.c.b16 %v2413, %v2412
        %v2417 = vpack.c.b16 %v2415, %v2414
        %v2421 = vsel %vm2380, %v2402, 0
        %2423 = vmatprep.subr.bf16.mxu0 0
        %2424 = vmatpush1.bf16.msra.mxu0 %v2416
        %2425 = vmatprep.subr.bf16.mxu0 0
        %2426 = vmatpush1.bf16.msra.mxu0 %v2417
        %2427 = vmatprep.subr.bf16.mxu0 0
        %2428 = vmatpush1.bf16.msra.mxu0 0
        %2429 = vmatprep.subr.bf16.mxu0 0
        %2430 = vmatpush1.bf16.msra.mxu0 0
        %2431 = vmatprep.subr.bf16.mxu0 0
        %2432 = vmatpush1.bf16.msra.mxu0 0
        %2433 = vmatprep.subr.bf16.mxu0 0
        %2434 = vmatpush1.bf16.msra.mxu0 0
        %2435 = vmatprep.subr.bf16.mxu0 0
        %2436 = vmatpush1.bf16.msra.mxu0 0
        %2437 = vmatprep.subr.bf16.mxu0 0
        %2438 = vmatpush1.bf16.msra.mxu0 0
        %2439 = vmatprep.subr.bf16.mxu0 0
        %2440 = vmatpush1.bf16.msra.mxu0 0
        %2441 = vmatprep.subr.bf16.mxu0 0
        %2442 = vmatpush1.bf16.msra.mxu0 0
        %2443 = vmatprep.subr.bf16.mxu0 0
        %2444 = vmatpush1.bf16.msra.mxu0 0
        %2445 = vmatprep.subr.bf16.mxu0 0
        %2446 = vmatpush1.bf16.msra.mxu0 0
        %2447 = vmatprep.subr.bf16.mxu0 0
        %2448 = vmatpush1.bf16.msra.mxu0 0
        %2449 = vmatprep.subr.bf16.mxu0 0
        %2450 = vmatpush1.bf16.msra.mxu0 0
        %2451 = vmatprep.subr.bf16.mxu0 0
        %2452 = vmatpush1.bf16.msra.mxu0 0
        %2453 = vmatprep.subr.bf16.mxu0 0
        %2454 = vmatpush1.bf16.msra.mxu0 0
        %2455 = vmatprep.mubr.bf16.mxu0 0
        %2456 = vmatmul.mubr.bf16.gmra.mrb[0].mxu0 %v2421
        %v2457 = vpop.f32.mrb[0].mxu0
        %v2458 = vadd.f32 %v2407, %v2457
        %v2459 = vpop.f32.mrb[0].mxu0
        %v2460 = vpop.f32.mrb[0].mxu0
        %v2461 = vpop.f32.mrb[0].mxu0
        %2462 = vdwg.mxu0
        %vm2463 = vcmask 253952
        %2464 = vst.msk [vmem:[%s355] sm:$0x1] %vm2463, %v2458
        %2466 = vrot.lane.b32.xlu0 %v2458, 96
        %v2467 = vpop.permute.xlu0 %2466
        %2469 = vst.msk [vmem:[%s361] sm:$0x1] %vm2463, %v2467
        %v2470 = vmul.f32 %v2458, %v2467
        %v2471 = vsel %vm2463, %v2470, 0.0
        %2472 = vadd.xlane.f32.xlu0 %v2471
        %v2473 = vpop.xlane.xlu0 %2472
        %vm2474 = vcmask 0
        %2475 = vst.msk [vmem:[%s374] sm:$0x1] %vm2474, %v2473
        %s2476 = sand.u32 %s209, 1
        %s2477 = scalar_lea.sflag [#allocation3], %s2476
        %s2478 = sand.u32 %s209, 1
        %s2479 = scalar_lea.vmem [#allocation2], %s2478
        %s2480 = sand.u32 %s235, 1
        %s2481 = scalar_lea.sflag [#allocation5], %s2480
        %s2482 = sand.u32 %s235, 1
        %s2483 = scalar_lea.vmem [#allocation4], %s2482
        %p2484 = scmp.lt.s32.totalorder %s28, 1
        %s2485 = scalar_select %p2484, %s28, 1
        %s2486 = scalar_lea.vmem %s10, %s2485
        // Predicated region
        $region60: #{transformer_forward.1} parent=51 // pred_check
          %p2487 = pneg %p219
        $region61: #{transformer_forward.1} parent=51 // pred_check_branch
          %2489 = sbr.rel (%p2487) target = $region63
        $region62: #{transformer_forward.1} parent=51 // pred_region
          %s2491 = ssub.s32 16, 16
          %2492 = vsyncadd %s2477, %s2491
          %s2493 = smul.addr %s28, 16
          %s2494 = scalar_lea.hbm %s8, %s2493
          %s2496 = sshll.u32 %s2479, 4
          %s2497 = int_to_ptr.vmem [resolvable:$true] %s2496
          %2499 = dma.vmem_to_hbm [thread:$0]  %s2497, 16, %s2494, %s2477
        $region63: #{transformer_forward.1} parent=51 // pred_fallthru
          _
        // Predicated region
        $region64: #{transformer_forward.1} parent=51 // pred_check
          %p2500 = pneg %p245
        $region65: #{transformer_forward.1} parent=51 // pred_check_branch
          %2502 = sbr.rel (%p2500) target = $region67
        $region66: #{transformer_forward.1} parent=51 // pred_region
          %s2504 = ssub.s32 16, 16
          %2505 = vsyncadd %s2481, %s2504
          %s2506 = smul.addr %s28, 16
          %s2507 = scalar_lea.hbm %s9, %s2506
          %s2509 = sshll.u32 %s2483, 4
          %s2510 = int_to_ptr.vmem [resolvable:$true] %s2509
          %2512 = dma.vmem_to_hbm [thread:$0]  %s2510, 16, %s2507, %s2481
        $region67: #{transformer_forward.1} parent=51 // pred_fallthru
          _
        // Predicated region
        $region68: #{transformer_forward.1} parent=51 // pred_check
          %p2513 = pneg %p271
        $region69: #{transformer_forward.1} parent=51 // pred_check_branch
          %2515 = sbr.rel (%p2513) target = $region71
        $region70: #{transformer_forward.1} parent=51 // pred_region
          _
        $region71: #{transformer_forward.1} parent=51 // pred_fallthru
          _
      $region52: #{transformer_forward.1} parent=5 // pred_fallthru
        _
      %p2516 = scmp.le.s32.totalorder 2, %s23
      // Predicated region
      $region72: #{transformer_forward.1} parent=5 // pred_check
        %p2517 = pneg %p2516
      $region73: #{transformer_forward.1} parent=5 // pred_check_branch
        %2519 = sbr.rel (%p2517) target = $region75
      $region74: #{transformer_forward.1} parent=5 // pred_region
        %s2520 = ssub.s32 %s23, 2
        // Predicated region
        $region76: #{transformer_forward.1} parent=74 // pred_check
          %p2521 = pneg %p225
        $region77: #{transformer_forward.1} parent=74 // pred_check_branch
          %2523 = sbr.rel (%p2521) target = $region79
        $region78: #{transformer_forward.1} parent=74 // pred_region
          %s2524 = sand.u32 %s210, 1
          %s2525 = scalar_lea.sflag [#allocation3], %s2524
          %s2526 = sand.u32 %s210, 1
          %s2527 = scalar_lea.vmem [#allocation2], %s2526
          %2528 = dma.done %s2525, 16
        $region79: #{transformer_forward.1} parent=74 // pred_fallthru
          _
        // Predicated region
        $region80: #{transformer_forward.1} parent=74 // pred_check
          %p2529 = pneg %p251
        $region81: #{transformer_forward.1} parent=74 // pred_check_branch
          %2531 = sbr.rel (%p2529) target = $region83
        $region82: #{transformer_forward.1} parent=74 // pred_region
          %s2532 = sand.u32 %s236, 1
          %s2533 = scalar_lea.sflag [#allocation5], %s2532
          %s2534 = sand.u32 %s236, 1
          %s2535 = scalar_lea.vmem [#allocation4], %s2534
          %2536 = dma.done %s2533, 16
        $region83: #{transformer_forward.1} parent=74 // pred_fallthru
          _
        // Predicated region
        $region84: #{transformer_forward.1} parent=74 // pred_check
          %p2537 = pneg %p277
        $region85: #{transformer_forward.1} parent=74 // pred_check_branch
          %2539 = sbr.rel (%p2537) target = $region87
        $region86: #{transformer_forward.1} parent=74 // pred_region
          %p2540 = scmp.lt.s32.totalorder %s29, 1
          %s2541 = scalar_select %p2540, %s29, 1
          %s2542 = scalar_lea.vmem %s10, %s2541
        $region87: #{transformer_forward.1} parent=74 // pred_fallthru
          _
      $region75: #{transformer_forward.1} parent=5 // pred_fallthru
        _
    $region6: #{transformer_forward.1} parent=1 // loop_footer
      %s27 = sadd.s32 1, %s23
    $region7: #{transformer_forward.1} parent=1 // loop_footer_branch
      %22 = sbr.rel target = $region3
    $region8: #{transformer_forward.1} parent=1 // loop_exit
      _
    %2543 = vsyncpa [#allocation3], 1
    %s2544 = scalar_lea.sflag [#allocation3], 1
    %2545 = vsyncpa %s2544, 1
    %2546 = vsyncpa [#allocation5], 1
    %s2547 = scalar_lea.sflag [#allocation5], 1
    %2548 = vsyncpa %s2547, 1

</llo_original>
